<compile_context>
chip_gen: v7x
topology: tpu7x:2x2x1
jax: 0.10.0
libtpu: 0.0.40
codegen_flags: <defaults>
</compile_context>

<pallas_src>
import jax
import jax.numpy as jnp
from jax.experimental import pallas as pl
from jax.experimental.pallas import tpu as pltpu

EPS = 1e-5     # BatchNorm1d default eps
KSIZE = 8      # kernel_size used by decode_stage


def _vmem():
    return pl.BlockSpec(memory_space=pltpu.MemorySpace.VMEM)


def _smem():
    return pl.BlockSpec(memory_space=pltpu.MemorySpace.SMEM)


# --------------------------------------------------------------------------
# Host-side weight packing (done once, outside jit)
# --------------------------------------------------------------------------
def _flipped_taps(w):
    """PyTorch ConvTranspose1d weight (Cin, Cout, K) -> (K, Cout, Cin) with
    taps[j][o, c] = w[c, o, K-1-j] (the stride-1 equivalent conv kernel)."""
    return jnp.transpose(jnp.flip(w, axis=-1), (2, 1, 0))


def pack_stride1(w):
    """-> (Cout, K*Cin) im2col weight of the cropped stride-1 transposed conv."""
    wf = _flipped_taps(w)                                   # (K, Cout, Cin)
    k, cout, cin = wf.shape
    return jnp.transpose(wf, (1, 0, 2)).reshape(cout, k * cin)


def pack_stride2(w):
    """-> (W_even, W_odd), each (Cout, (K//2)*Cin): polyphase weights of the
    cropped stride-2 transposed conv."""
    wf = _flipped_taps(w)                                   # (K, Cout, Cin)
    k, cout, cin = wf.shape
    we = jnp.transpose(wf[0::2], (1, 0, 2)).reshape(cout, (k // 2) * cin)
    wo = jnp.transpose(wf[1::2], (1, 0, 2)).reshape(cout, (k // 2) * cin)
    return we, wo


# --------------------------------------------------------------------------
# Pallas kernels
# --------------------------------------------------------------------------
def _upsample_tconv_bn_prelu_kernel(x_ref, we_ref, wo_ref, g_ref, b_ref, a_ref,
                                    o_ref, xpad_ref):
    """Fused stride-2 ConvTranspose1d(K=8, bias=False) [polyphase] + center
    crop + training-mode BatchNorm1d + PReLU.

    x_ref : (N, Cin, L)          we_ref / wo_ref : (Cout, 4*Cin)
    g_ref / b_ref : (Cout, 1)    a_ref : (1, 1) SMEM (shared PReLU alpha)
    o_ref : (2*N, Cout, L)       phase-major: o[ph*N + n, :, u] == y[n, :, 2u+ph]
    xpad_ref : (N, Cin, L+4)     VMEM scratch (2 zeros left / 2 right)
    """
    n_b, _, L = x_ref.shape
    alpha = a_ref[0, 0]

    # zero-padded copy of the input, VMEM only
    xpad_ref[...] = jnp.zeros_like(xpad_ref)
    for n in range(n_b):
        xpad_ref[n, :, 2:2 + L] = x_ref[n]

    # polyphase im2col RHS: 4 taps stacked on sublanes, batch folded into lanes
    def build_rhs(off):
        cols = []
        for n in range(n_b):
            xp = xpad_ref[n]                                       # (Cin, L+4)
            cols.append(jnp.concatenate(
                [xp[:, off + p:off + p + L] for p in range(KSIZE // 2)],
                axis=0))                                           # (4*Cin, L)
        return jnp.concatenate(cols, axis=1)                       # (4*Cin, N*L)

    ye = jnp.dot(we_ref[...], build_rhs(0), preferred_element_type=jnp.float32)
    yo = jnp.dot(wo_ref[...], build_rhs(1), preferred_element_type=jnp.float32)

    # BatchNorm over both phases (all N * 2L positions), single pass, + PReLU
    cnt = 2.0 * n_b * L
    mean = (jnp.sum(ye, axis=1, keepdims=True)
            + jnp.sum(yo, axis=1, keepdims=True)) / cnt
    ex2 = (jnp.sum(ye * ye, axis=1, keepdims=True)
           + jnp.sum(yo * yo, axis=1, keepdims=True)) / cnt
    var = ex2 - mean * mean
    scale = jax.lax.rsqrt(var + EPS) * g_ref[...]
    shift = b_ref[...] - mean * scale

    def bn_act(y):
        z = y * scale + shift
        return jnp.where(z >= 0.0, z, alpha * z)

    ye = bn_act(ye)
    yo = bn_act(yo)
    for n in range(n_b):
        o_ref[n] = ye[:, n * L:(n + 1) * L]             # even-phase block
        o_ref[n_b + n] = yo[:, n * L:(n + 1) * L]       # odd-phase block


def _double_tconv_bn_prelu_kernel(s_ref, w2_ref, g2_ref, b2_ref,
                                  w3_ref, g3_ref, b3_ref, a_ref,
                                  o_ref, pad1_ref, pad2_ref):
    """Fused [stride-1 ConvTranspose1d(K=8, bias=False) + crop + BN + PReLU] x2.

    s_ref : (N, C1, T)   w2_ref : (C2, 8*C1)   w3_ref : (C3, 8*C2)
    g*/b* : (C, 1)       a_ref  : (1, 1) SMEM  o_ref  : (N, C3, T)
    pad1_ref : (N, C1, T+7) scratch            pad2_ref : (N, C2, T+7) scratch
    """
    n_b, _, T = s_ref.shape
    alpha = a_ref[0, 0]
    PAD_L = 4        # K-1=7 border, left crop 3  ->  4 zeros left, 3 right

    def fused_layer(pad_ref, w_ref, g_ref, b_ref):
        # im2col RHS: 8 shifted slices on sublanes, batch folded into lanes
        cols = []
        for n in range(n_b):
            xp = pad_ref[n]                                        # (C, T+7)
            cols.append(jnp.concatenate(
                [xp[:, k:k + T] for k in range(KSIZE)], axis=0))   # (8C, T)
        rhs = jnp.concatenate(cols, axis=1)                        # (8C, N*T)
        y = jnp.dot(w_ref[...], rhs, preferred_element_type=jnp.float32)
        # one-pass training-mode BatchNorm1d (biased var) + PReLU epilogue
        cnt = float(n_b * T)
        mean = jnp.sum(y, axis=1, keepdims=True) / cnt
        var = jnp.sum(y * y, axis=1, keepdims=True) / cnt - mean * mean
        scale = jax.lax.rsqrt(var + EPS) * g_ref[...]
        shift = b_ref[...] - mean * scale
        z = y * scale + shift
        return jnp.where(z >= 0.0, z, alpha * z)                   # (Cout, N*T)

    # ---- conv2 ----
    pad1_ref[...] = jnp.zeros_like(pad1_ref)
    for n in range(n_b):
        pad1_ref[n, :, PAD_L:PAD_L + T] = s_ref[n]
    y2 = fused_layer(pad1_ref, w2_ref, g2_ref, b2_ref)

    # ---- conv3 (intermediate never leaves VMEM) ----
    pad2_ref[...] = jnp.zeros_like(pad2_ref)
    for n in range(n_b):
        pad2_ref[n, :, PAD_L:PAD_L + T] = y2[:, n * T:(n + 1) * T]
    y3 = fused_layer(pad2_ref, w3_ref, g3_ref, b3_ref)

    for n in range(n_b):
        o_ref[n] = y3[:, n * T:(n + 1) * T]


# --------------------------------------------------------------------------
# Pallas wrappers
# --------------------------------------------------------------------------
def fused_upsample_layer(x, we, wo, gamma, beta, alpha):
    """trans_conv1d_act_norm(K=8, stride=2): (N, Cin, L) -> (N, Cout, 2L)."""
    n, cin, L = x.shape
    cout = we.shape[0]
    phases = pl.pallas_call(
        _upsample_tconv_bn_prelu_kernel,
        out_shape=jax.ShapeDtypeStruct((2 * n, cout, L), jnp.float32),
        in_specs=[_vmem()] * 5 + [_smem()],
        out_specs=_vmem(),
        scratch_shapes=[pltpu.VMEM((n, cin, L + 4), jnp.float32)],
    )(x, we, wo, gamma.reshape(cout, 1), beta.reshape(cout, 1),
      jnp.reshape(alpha, (1, 1)).astype(jnp.float32))
    # interleave the two polyphase outputs (tiny XLA op)
    phases = phases.reshape(2, n, cout, L)
    return jnp.transpose(phases, (1, 2, 3, 0)).reshape(n, cout, 2 * L)


def fused_double_conv(s, w2, g2, b2, w3, g3, b3, alpha):
    """Two fused trans_conv1d_act_norm(K=8, stride=1) layers: (N,C1,T)->(N,C3,T)."""
    n, c1, T = s.shape
    c2 = w2.shape[0]
    c3 = w3.shape[0]
    return pl.pallas_call(
        _double_tconv_bn_prelu_kernel,
        out_shape=jax.ShapeDtypeStruct((n, c3, T), jnp.float32),
        in_specs=[_vmem()] * 7 + [_smem()],
        out_specs=_vmem(),
        scratch_shapes=[pltpu.VMEM((n, c1, T + 7), jnp.float32),
                        pltpu.VMEM((n, c2, T + 7), jnp.float32)],
    )(s, w2, g2.reshape(c2, 1), b2.reshape(c2, 1),
      w3, g3.reshape(c3, 1), b3.reshape(c3, 1),
      jnp.reshape(alpha, (1, 1)).astype(jnp.float32))


def decode_stage_forward(packed, x, skip):
    """decode_stage.forward(x, y): x (N,Cin,L), skip (N,Cskip,2L) -> (N,Cskip,2L)."""
    alpha = packed['alpha']
    up = fused_upsample_layer(x, packed['we1'], packed['wo1'],
                              packed['g1'], packed['b1'], alpha)
    s = jnp.concatenate([up, skip], axis=1)          # torch.cat((x, y), 1)
    return fused_double_conv(s, packed['w2'], packed['g2'], packed['b2'],
                             packed['w3'], packed['g3'], packed['b3'], alpha)


# --------------------------------------------------------------------------
# Pure-JAX reference of the PyTorch module (sanity check only)
# --------------------------------------------------------------------------
def _ref_layer(x, w, gamma, beta, alpha, stride):
    cin, cout, k = w.shape
    kern = jnp.transpose(jnp.flip(w, axis=-1), (1, 0, 2))        # (Cout, Cin, K)
    y = jax.lax.conv_general_dilated(
        x, kern, window_strides=(1,), padding=[(k - 1, k - 1)],
        lhs_dilation=(stride,), rhs_dilation=(1,),
        dimension_numbers=('NCH', 'OIH', 'NCH'))
    ori, new = x.shape[-1], y.shape[-1]
    pad_w = abs(ori * stride - new)
    if pad_w > 0:
        y = y[:, :, pad_w // 2:new - (pad_w - pad_w // 2)]
    mean = jnp.mean(y, axis=(0, 2), keepdims=True)
    var = jnp.mean((y - mean) ** 2, axis=(0, 2), keepdims=True)
    y = (y - mean) * jax.lax.rsqrt(var + EPS) * gamma[None, :, None] \
        + beta[None, :, None]
    return jnp.where(y >= 0.0, y, alpha * y)


def _ref_decode_stage(raw, x, skip):
    a = raw['alpha']
    up = _ref_layer(x, raw['w1'], raw['g1'], raw['b1'], a, 2)
    s = jnp.concatenate([up, skip], axis=1)
    s = _ref_layer(s, raw['w2'], raw['g2'], raw['b2'], a, 1)
    return _ref_layer(s, raw['w3'], raw['g3'], raw['b3'], a, 1)


# --------------------------------------------------------------------------
# Deterministic synthetic parameters (PyTorch layouts) + packing
# --------------------------------------------------------------------------
def init_params(key, in_ch, out_ch):
    k1, k2, k3 = jax.random.split(key, 3)

    def tconv(k, cin, cout):
        return 0.1 * jax.random.normal(k, (cin, cout, KSIZE), jnp.float32)

    return {
        'w1': tconv(k1, in_ch, in_ch),                 # conv1_upsample
        'g1': jnp.ones((in_ch,), jnp.float32),
        'b1': jnp.zeros((in_ch,), jnp.float32),
        'w2': tconv(k2, in_ch + out_ch, out_ch),       # conv2
        'g2': jnp.ones((out_ch,), jnp.float32),
        'b2': jnp.zeros((out_ch,), jnp.float32),
        'w3': tconv(k3, out_ch, out_ch),               # conv3
        'g3': jnp.ones((out_ch,), jnp.float32),
        'b3': jnp.zeros((out_ch,), jnp.float32),
        'alpha': jnp.float32(0.25),                    # shared nn.PReLU() weight
    }


def pack_params(raw):
    we1, wo1 = pack_stride2(raw['w1'])
    return {
        'we1': we1, 'wo1': wo1, 'g1': raw['g1'], 'b1': raw['b1'],
        'w2': pack_stride1(raw['w2']), 'g2': raw['g2'], 'b2': raw['b2'],
        'w3': pack_stride1(raw['w3']), 'g3': raw['g3'], 'b3': raw['b3'],
        'alpha': raw['alpha'],
    }


# --------------------------------------------------------------------------
if __name__ == "__main__":
    key = jax.random.PRNGKey(0)
    kp, kx, ks = jax.random.split(key, 3)

    IN_CH, OUT_CH = 16, 8        # e.g. the 16 -> 8 decode stage of the LUDB U-Net
    N, L = 2, 64                 # x: (N, IN_CH, L), skip: (N, OUT_CH, 2L)

    raw = init_params(kp, IN_CH, OUT_CH)
    packed = pack_params(raw)    # host-side weight flip / im2col / polyphase packing

    x = jax.random.normal(kx, (N, IN_CH, L), jnp.float32)
    skip = jax.random.normal(ks, (N, OUT_CH, 2 * L), jnp.float32)

    fwd = jax.jit(decode_stage_forward)
    out = fwd(packed, x, skip)
    jax.block_until_ready(out)

    assert out.shape == (N, OUT_CH, 2 * L) and out.dtype == jnp.float32
    assert bool(jnp.all(jnp.isfinite(out)))

    # sanity check against the pure-JAX reference of the PyTorch module
    ref = _ref_decode_stage(raw, x, skip)
    assert jnp.allclose(out, ref, atol=5e-2, rtol=5e-2), (
        "max abs diff %e" % float(jnp.max(jnp.abs(out - ref))))

    print("KERNEL_OK")
</pallas_src>

<mosaic_0001>
module attributes {stable_mosaic.version = 11 : i64} {
  func.func @_upsample_tconv_bn_prelu_kernel(%arg0: memref<2x16x64xf32, #tpu.memory_space<vmem>>, %arg1: memref<16x64xf32, #tpu.memory_space<vmem>>, %arg2: memref<16x64xf32, #tpu.memory_space<vmem>>, %arg3: memref<16x1xf32, #tpu.memory_space<vmem>>, %arg4: memref<16x1xf32, #tpu.memory_space<vmem>>, %arg5: memref<1x1xf32, #tpu.memory_space<smem>>, %arg6: memref<4x16x64xf32, #tpu.memory_space<vmem>>, %arg7: memref<2x16x68xf32, #tpu.memory_space<vmem>>) attributes {dimension_semantics = [], scalar_prefetch = 0 : i64, scratch_operands = 1 : i64, tpu.core_type = #tpu.core_type<tc>} {
    %c0 = arith.constant 0 : index
    %c0_0 = arith.constant 0 : index
    %0 = memref.load %arg5[%c0, %c0_0] : memref<1x1xf32, #tpu.memory_space<smem>>
    %cst = arith.constant 0.000000e+00 : f32
    %1 = vector.broadcast %cst : f32 to vector<2x16x68xf32>
    %c0_1 = arith.constant 0 : index
    %c0_2 = arith.constant 0 : index
    %c0_3 = arith.constant 0 : index
    %2 = vector.load %arg7[%c0_1, %c0_2, %c0_3] : memref<2x16x68xf32, #tpu.memory_space<vmem>>, vector<2x16x68xf32>
    tpu.vector_store %arg7[%c0_1, %c0_2, %c0_3], %1 {strides = array<i32>} : memref<2x16x68xf32, #tpu.memory_space<vmem>>, vector<2x16x68xf32>,
    %c0_4 = arith.constant 0 : index
    %c0_5 = arith.constant 0 : index
    %c0_6 = arith.constant 0 : index
    %3 = vector.load %arg0[%c0_4, %c0_5, %c0_6] : memref<2x16x64xf32, #tpu.memory_space<vmem>>, vector<1x16x64xf32>
    %4 = vector.shape_cast %3 : vector<1x16x64xf32> to vector<16x64xf32>
    %c0_7 = arith.constant 0 : index
    %c0_8 = arith.constant 0 : index
    %c2 = arith.constant 2 : index
    %5 = vector.load %arg7[%c0_7, %c0_8, %c2] : memref<2x16x68xf32, #tpu.memory_space<vmem>>, vector<1x16x64xf32>
    %6 = vector.shape_cast %5 : vector<1x16x64xf32> to vector<16x64xf32>
    %7 = vector.shape_cast %4 : vector<16x64xf32> to vector<1x16x64xf32>
    tpu.vector_store %arg7[%c0_7, %c0_8, %c2], %7 {strides = array<i32>} : memref<2x16x68xf32, #tpu.memory_space<vmem>>, vector<1x16x64xf32>,
    %c1 = arith.constant 1 : index
    %c0_9 = arith.constant 0 : index
    %c0_10 = arith.constant 0 : index
    %8 = vector.load %arg0[%c1, %c0_9, %c0_10] : memref<2x16x64xf32, #tpu.memory_space<vmem>>, vector<1x16x64xf32>
    %9 = vector.shape_cast %8 : vector<1x16x64xf32> to vector<16x64xf32>
    %c1_11 = arith.constant 1 : index
    %c0_12 = arith.constant 0 : index
    %c2_13 = arith.constant 2 : index
    %10 = vector.load %arg7[%c1_11, %c0_12, %c2_13] : memref<2x16x68xf32, #tpu.memory_space<vmem>>, vector<1x16x64xf32>
    %11 = vector.shape_cast %10 : vector<1x16x64xf32> to vector<16x64xf32>
    %12 = vector.shape_cast %9 : vector<16x64xf32> to vector<1x16x64xf32>
    tpu.vector_store %arg7[%c1_11, %c0_12, %c2_13], %12 {strides = array<i32>} : memref<2x16x68xf32, #tpu.memory_space<vmem>>, vector<1x16x64xf32>,
    %c0_14 = arith.constant 0 : index
    %c0_15 = arith.constant 0 : index
    %13 = vector.load %arg1[%c0_14, %c0_15] : memref<16x64xf32, #tpu.memory_space<vmem>>, vector<16x64xf32>
    %c0_16 = arith.constant 0 : index
    %c0_17 = arith.constant 0 : index
    %c0_18 = arith.constant 0 : index
    %14 = vector.load %arg7[%c0_16, %c0_17, %c0_18] : memref<2x16x68xf32, #tpu.memory_space<vmem>>, vector<1x16x68xf32>
    %15 = vector.shape_cast %14 : vector<1x16x68xf32> to vector<16x68xf32>
    %16 = vector.extract_strided_slice %15 {offsets = [0, 0], sizes = [16, 64], strides = [1, 1]} : vector<16x68xf32> to vector<16x64xf32>
    %17 = vector.extract_strided_slice %15 {offsets = [0, 1], sizes = [16, 64], strides = [1, 1]} : vector<16x68xf32> to vector<16x64xf32>
    %18 = vector.extract_strided_slice %15 {offsets = [0, 2], sizes = [16, 64], strides = [1, 1]} : vector<16x68xf32> to vector<16x64xf32>
    %19 = vector.extract_strided_slice %15 {offsets = [0, 3], sizes = [16, 64], strides = [1, 1]} : vector<16x68xf32> to vector<16x64xf32>
    %20 = tpu.concatenate %16, %17, %18, %19 in 0 : vector<16x64xf32>, vector<16x64xf32>, vector<16x64xf32>, vector<16x64xf32> -> vector<64x64xf32>
    %c1_19 = arith.constant 1 : index
    %c0_20 = arith.constant 0 : index
    %c0_21 = arith.constant 0 : index
    %21 = vector.load %arg7[%c1_19, %c0_20, %c0_21] : memref<2x16x68xf32, #tpu.memory_space<vmem>>, vector<1x16x68xf32>
    %22 = vector.shape_cast %21 : vector<1x16x68xf32> to vector<16x68xf32>
    %23 = vector.extract_strided_slice %22 {offsets = [0, 0], sizes = [16, 64], strides = [1, 1]} : vector<16x68xf32> to vector<16x64xf32>
    %24 = vector.extract_strided_slice %22 {offsets = [0, 1], sizes = [16, 64], strides = [1, 1]} : vector<16x68xf32> to vector<16x64xf32>
    %25 = vector.extract_strided_slice %22 {offsets = [0, 2], sizes = [16, 64], strides = [1, 1]} : vector<16x68xf32> to vector<16x64xf32>
    %26 = vector.extract_strided_slice %22 {offsets = [0, 3], sizes = [16, 64], strides = [1, 1]} : vector<16x68xf32> to vector<16x64xf32>
    %27 = tpu.concatenate %23, %24, %25, %26 in 0 : vector<16x64xf32>, vector<16x64xf32>, vector<16x64xf32>, vector<16x64xf32> -> vector<64x64xf32>
    %28 = tpu.concatenate %20, %27 in 1 : vector<64x64xf32>, vector<64x64xf32> -> vector<64x128xf32>
    %cst_22 = arith.constant dense<0.000000e+00> : vector<16x128xf32>
    %29 = tpu.matmul %13, %28, %cst_22 {dimension_numbers = #tpu.dot_dimension_numbers<[1], [0], [0], [1], [0, 0, 1, 1], [], []>} : vector<16x64xf32>, vector<64x128xf32>, vector<16x128xf32> -> vector<16x128xf32>
    %c0_23 = arith.constant 0 : index
    %c0_24 = arith.constant 0 : index
    %30 = vector.load %arg2[%c0_23, %c0_24] : memref<16x64xf32, #tpu.memory_space<vmem>>, vector<16x64xf32>
    %c0_25 = arith.constant 0 : index
    %c0_26 = arith.constant 0 : index
    %c0_27 = arith.constant 0 : index
    %31 = vector.load %arg7[%c0_25, %c0_26, %c0_27] : memref<2x16x68xf32, #tpu.memory_space<vmem>>, vector<1x16x68xf32>
    %32 = vector.shape_cast %31 : vector<1x16x68xf32> to vector<16x68xf32>
    %33 = vector.extract_strided_slice %32 {offsets = [0, 1], sizes = [16, 64], strides = [1, 1]} : vector<16x68xf32> to vector<16x64xf32>
    %34 = vector.extract_strided_slice %32 {offsets = [0, 2], sizes = [16, 64], strides = [1, 1]} : vector<16x68xf32> to vector<16x64xf32>
    %35 = vector.extract_strided_slice %32 {offsets = [0, 3], sizes = [16, 64], strides = [1, 1]} : vector<16x68xf32> to vector<16x64xf32>
    %36 = vector.extract_strided_slice %32 {offsets = [0, 4], sizes = [16, 64], strides = [1, 1]} : vector<16x68xf32> to vector<16x64xf32>
    %37 = tpu.concatenate %33, %34, %35, %36 in 0 : vector<16x64xf32>, vector<16x64xf32>, vector<16x64xf32>, vector<16x64xf32> -> vector<64x64xf32>
    %c1_28 = arith.constant 1 : index
    %c0_29 = arith.constant 0 : index
    %c0_30 = arith.constant 0 : index
    %38 = vector.load %arg7[%c1_28, %c0_29, %c0_30] : memref<2x16x68xf32, #tpu.memory_space<vmem>>, vector<1x16x68xf32>
    %39 = vector.shape_cast %38 : vector<1x16x68xf32> to vector<16x68xf32>
    %40 = vector.extract_strided_slice %39 {offsets = [0, 1], sizes = [16, 64], strides = [1, 1]} : vector<16x68xf32> to vector<16x64xf32>
    %41 = vector.extract_strided_slice %39 {offsets = [0, 2], sizes = [16, 64], strides = [1, 1]} : vector<16x68xf32> to vector<16x64xf32>
    %42 = vector.extract_strided_slice %39 {offsets = [0, 3], sizes = [16, 64], strides = [1, 1]} : vector<16x68xf32> to vector<16x64xf32>
    %43 = vector.extract_strided_slice %39 {offsets = [0, 4], sizes = [16, 64], strides = [1, 1]} : vector<16x68xf32> to vector<16x64xf32>
    %44 = tpu.concatenate %40, %41, %42, %43 in 0 : vector<16x64xf32>, vector<16x64xf32>, vector<16x64xf32>, vector<16x64xf32> -> vector<64x64xf32>
    %45 = tpu.concatenate %37, %44 in 1 : vector<64x64xf32>, vector<64x64xf32> -> vector<64x128xf32>
    %cst_31 = arith.constant dense<0.000000e+00> : vector<16x128xf32>
    %46 = tpu.matmul %30, %45, %cst_31 {dimension_numbers = #tpu.dot_dimension_numbers<[1], [0], [0], [1], [0, 0, 1, 1], [], []>} : vector<16x64xf32>, vector<64x128xf32>, vector<16x128xf32> -> vector<16x128xf32>
    %cst_32 = arith.constant dense<0.000000e+00> : vector<16xf32>
    %47 = vector.multi_reduction <add>, %29, %cst_32 [1] : vector<16x128xf32> to vector<16xf32>
    %48 = vector.shape_cast %47 : vector<16xf32> to vector<16x1xf32>
    %cst_33 = arith.constant dense<0.000000e+00> : vector<16xf32>
    %49 = vector.multi_reduction <add>, %46, %cst_33 [1] : vector<16x128xf32> to vector<16xf32>
    %50 = vector.shape_cast %49 : vector<16xf32> to vector<16x1xf32>
    %51 = arith.addf %48, %50 : vector<16x1xf32>
    %cst_34 = arith.constant 2.560000e+02 : f32
    %52 = vector.broadcast %cst_34 : f32 to vector<16x1xf32>
    %53 = arith.divf %51, %52 : vector<16x1xf32>
    %54 = arith.mulf %29, %29 : vector<16x128xf32>
    %cst_35 = arith.constant dense<0.000000e+00> : vector<16xf32>
    %55 = vector.multi_reduction <add>, %54, %cst_35 [1] : vector<16x128xf32> to vector<16xf32>
    %56 = vector.shape_cast %55 : vector<16xf32> to vector<16x1xf32>
    %57 = arith.mulf %46, %46 : vector<16x128xf32>
    %cst_36 = arith.constant dense<0.000000e+00> : vector<16xf32>
    %58 = vector.multi_reduction <add>, %57, %cst_36 [1] : vector<16x128xf32> to vector<16xf32>
    %59 = vector.shape_cast %58 : vector<16xf32> to vector<16x1xf32>
    %60 = arith.addf %56, %59 : vector<16x1xf32>
    %cst_37 = arith.constant 2.560000e+02 : f32
    %61 = vector.broadcast %cst_37 : f32 to vector<16x1xf32>
    %62 = arith.divf %60, %61 : vector<16x1xf32>
    %63 = arith.mulf %53, %53 : vector<16x1xf32>
    %64 = arith.subf %62, %63 : vector<16x1xf32>
    %cst_38 = arith.constant 9.99999974E-6 : f32
    %65 = vector.broadcast %cst_38 : f32 to vector<16x1xf32>
    %66 = arith.addf %64, %65 : vector<16x1xf32>
    %67 = math.rsqrt %66 : vector<16x1xf32>
    %c0_39 = arith.constant 0 : index
    %c0_40 = arith.constant 0 : index
    %68 = vector.load %arg3[%c0_39, %c0_40] : memref<16x1xf32, #tpu.memory_space<vmem>>, vector<16x1xf32>
    %69 = arith.mulf %67, %68 : vector<16x1xf32>
    %c0_41 = arith.constant 0 : index
    %c0_42 = arith.constant 0 : index
    %70 = vector.load %arg4[%c0_41, %c0_42] : memref<16x1xf32, #tpu.memory_space<vmem>>, vector<16x1xf32>
    %71 = arith.mulf %53, %69 : vector<16x1xf32>
    %72 = arith.subf %70, %71 : vector<16x1xf32>
    %73 = vector.broadcast %69 : vector<16x1xf32> to vector<16x128xf32>
    %74 = arith.mulf %29, %73 : vector<16x128xf32>
    %75 = vector.broadcast %72 : vector<16x1xf32> to vector<16x128xf32>
    %76 = arith.addf %74, %75 : vector<16x128xf32>
    %cst_43 = arith.constant 0.000000e+00 : f32
    %77 = vector.broadcast %cst_43 : f32 to vector<16x128xf32>
    %78 = arith.cmpf oge, %76, %77 : vector<16x128xf32>
    %79 = vector.broadcast %0 : f32 to vector<16x128xf32>
    %80 = arith.mulf %79, %76 : vector<16x128xf32>
    %81 = arith.select %78, %76, %80 : vector<16x128xi1>, vector<16x128xf32>
    %82 = vector.broadcast %69 : vector<16x1xf32> to vector<16x128xf32>
    %83 = arith.mulf %46, %82 : vector<16x128xf32>
    %84 = vector.broadcast %72 : vector<16x1xf32> to vector<16x128xf32>
    %85 = arith.addf %83, %84 : vector<16x128xf32>
    %cst_44 = arith.constant 0.000000e+00 : f32
    %86 = vector.broadcast %cst_44 : f32 to vector<16x128xf32>
    %87 = arith.cmpf oge, %85, %86 : vector<16x128xf32>
    %88 = vector.broadcast %0 : f32 to vector<16x128xf32>
    %89 = arith.mulf %88, %85 : vector<16x128xf32>
    %90 = arith.select %87, %85, %89 : vector<16x128xi1>, vector<16x128xf32>
    %91 = vector.extract_strided_slice %81 {offsets = [0, 0], sizes = [16, 64], strides = [1, 1]} : vector<16x128xf32> to vector<16x64xf32>
    %c0_45 = arith.constant 0 : index
    %c0_46 = arith.constant 0 : index
    %c0_47 = arith.constant 0 : index
    %92 = vector.load %arg6[%c0_45, %c0_46, %c0_47] : memref<4x16x64xf32, #tpu.memory_space<vmem>>, vector<1x16x64xf32>
    %93 = vector.shape_cast %92 : vector<1x16x64xf32> to vector<16x64xf32>
    %94 = vector.shape_cast %91 : vector<16x64xf32> to vector<1x16x64xf32>
    tpu.vector_store %arg6[%c0_45, %c0_46, %c0_47], %94 {strides = array<i32>} : memref<4x16x64xf32, #tpu.memory_space<vmem>>, vector<1x16x64xf32>,
    %95 = vector.extract_strided_slice %90 {offsets = [0, 0], sizes = [16, 64], strides = [1, 1]} : vector<16x128xf32> to vector<16x64xf32>
    %c2_48 = arith.constant 2 : index
    %c0_49 = arith.constant 0 : index
    %c0_50 = arith.constant 0 : index
    %96 = vector.load %arg6[%c2_48, %c0_49, %c0_50] : memref<4x16x64xf32, #tpu.memory_space<vmem>>, vector<1x16x64xf32>
    %97 = vector.shape_cast %96 : vector<1x16x64xf32> to vector<16x64xf32>
    %98 = vector.shape_cast %95 : vector<16x64xf32> to vector<1x16x64xf32>
    tpu.vector_store %arg6[%c2_48, %c0_49, %c0_50], %98 {strides = array<i32>} : memref<4x16x64xf32, #tpu.memory_space<vmem>>, vector<1x16x64xf32>,
    %99 = vector.extract_strided_slice %81 {offsets = [0, 64], sizes = [16, 64], strides = [1, 1]} : vector<16x128xf32> to vector<16x64xf32>
    %c1_51 = arith.constant 1 : index
    %c0_52 = arith.constant 0 : index
    %c0_53 = arith.constant 0 : index
    %100 = vector.load %arg6[%c1_51, %c0_52, %c0_53] : memref<4x16x64xf32, #tpu.memory_space<vmem>>, vector<1x16x64xf32>
    %101 = vector.shape_cast %100 : vector<1x16x64xf32> to vector<16x64xf32>
    %102 = vector.shape_cast %99 : vector<16x64xf32> to vector<1x16x64xf32>
    tpu.vector_store %arg6[%c1_51, %c0_52, %c0_53], %102 {strides = array<i32>} : memref<4x16x64xf32, #tpu.memory_space<vmem>>, vector<1x16x64xf32>,
    %103 = vector.extract_strided_slice %90 {offsets = [0, 64], sizes = [16, 64], strides = [1, 1]} : vector<16x128xf32> to vector<16x64xf32>
    %c3 = arith.constant 3 : index
    %c0_54 = arith.constant 0 : index
    %c0_55 = arith.constant 0 : index
    %104 = vector.load %arg6[%c3, %c0_54, %c0_55] : memref<4x16x64xf32, #tpu.memory_space<vmem>>, vector<1x16x64xf32>
    %105 = vector.shape_cast %104 : vector<1x16x64xf32> to vector<16x64xf32>
    %106 = vector.shape_cast %103 : vector<16x64xf32> to vector<1x16x64xf32>
    tpu.vector_store %arg6[%c3, %c0_54, %c0_55], %106 {strides = array<i32>} : memref<4x16x64xf32, #tpu.memory_space<vmem>>, vector<1x16x64xf32>,
    return
  }
}

module attributes {stable_mosaic.version = 11 : i64} {
  func.func @_double_tconv_bn_prelu_kernel(%arg0: memref<2x24x128xf32, #tpu.memory_space<vmem>>, %arg1: memref<8x192xf32, #tpu.memory_space<vmem>>, %arg2: memref<8x1xf32, #tpu.memory_space<vmem>>, %arg3: memref<8x1xf32, #tpu.memory_space<vmem>>, %arg4: memref<8x64xf32, #tpu.memory_space<vmem>>, %arg5: memref<8x1xf32, #tpu.memory_space<vmem>>, %arg6: memref<8x1xf32, #tpu.memory_space<vmem>>, %arg7: memref<1x1xf32, #tpu.memory_space<smem>>, %arg8: memref<2x8x128xf32, #tpu.memory_space<vmem>>, %arg9: memref<2x24x135xf32, #tpu.memory_space<vmem>>, %arg10: memref<2x8x135xf32, #tpu.memory_space<vmem>>) attributes {dimension_semantics = [], scalar_prefetch = 0 : i64, scratch_operands = 2 : i64, tpu.core_type = #tpu.core_type<tc>} {
    %c0 = arith.constant 0 : index
    %c0_0 = arith.constant 0 : index
    %0 = memref.load %arg7[%c0, %c0_0] : memref<1x1xf32, #tpu.memory_space<smem>>
    %cst = arith.constant 0.000000e+00 : f32
    %1 = vector.broadcast %cst : f32 to vector<2x24x135xf32>
    %c0_1 = arith.constant 0 : index
    %c0_2 = arith.constant 0 : index
    %c0_3 = arith.constant 0 : index
    %2 = vector.load %arg9[%c0_1, %c0_2, %c0_3] : memref<2x24x135xf32, #tpu.memory_space<vmem>>, vector<2x24x135xf32>
    tpu.vector_store %arg9[%c0_1, %c0_2, %c0_3], %1 {strides = array<i32>} : memref<2x24x135xf32, #tpu.memory_space<vmem>>, vector<2x24x135xf32>,
    %c0_4 = arith.constant 0 : index
    %c0_5 = arith.constant 0 : index
    %c0_6 = arith.constant 0 : index
    %3 = vector.load %arg0[%c0_4, %c0_5, %c0_6] : memref<2x24x128xf32, #tpu.memory_space<vmem>>, vector<1x24x128xf32>
    %4 = vector.shape_cast %3 : vector<1x24x128xf32> to vector<24x128xf32>
    %c0_7 = arith.constant 0 : index
    %c0_8 = arith.constant 0 : index
    %c4 = arith.constant 4 : index
    %5 = vector.load %arg9[%c0_7, %c0_8, %c4] : memref<2x24x135xf32, #tpu.memory_space<vmem>>, vector<1x24x128xf32>
    %6 = vector.shape_cast %5 : vector<1x24x128xf32> to vector<24x128xf32>
    %7 = vector.shape_cast %4 : vector<24x128xf32> to vector<1x24x128xf32>
    tpu.vector_store %arg9[%c0_7, %c0_8, %c4], %7 {strides = array<i32>} : memref<2x24x135xf32, #tpu.memory_space<vmem>>, vector<1x24x128xf32>,
    %c1 = arith.constant 1 : index
    %c0_9 = arith.constant 0 : index
    %c0_10 = arith.constant 0 : index
    %8 = vector.load %arg0[%c1, %c0_9, %c0_10] : memref<2x24x128xf32, #tpu.memory_space<vmem>>, vector<1x24x128xf32>
    %9 = vector.shape_cast %8 : vector<1x24x128xf32> to vector<24x128xf32>
    %c1_11 = arith.constant 1 : index
    %c0_12 = arith.constant 0 : index
    %c4_13 = arith.constant 4 : index
    %10 = vector.load %arg9[%c1_11, %c0_12, %c4_13] : memref<2x24x135xf32, #tpu.memory_space<vmem>>, vector<1x24x128xf32>
    %11 = vector.shape_cast %10 : vector<1x24x128xf32> to vector<24x128xf32>
    %12 = vector.shape_cast %9 : vector<24x128xf32> to vector<1x24x128xf32>
    tpu.vector_store %arg9[%c1_11, %c0_12, %c4_13], %12 {strides = array<i32>} : memref<2x24x135xf32, #tpu.memory_space<vmem>>, vector<1x24x128xf32>,
    %c0_14 = arith.constant 0 : index
    %c0_15 = arith.constant 0 : index
    %c0_16 = arith.constant 0 : index
    %13 = vector.load %arg9[%c0_14, %c0_15, %c0_16] : memref<2x24x135xf32, #tpu.memory_space<vmem>>, vector<1x24x135xf32>
    %14 = vector.shape_cast %13 : vector<1x24x135xf32> to vector<24x135xf32>
    %15 = vector.extract_strided_slice %14 {offsets = [0, 0], sizes = [24, 128], strides = [1, 1]} : vector<24x135xf32> to vector<24x128xf32>
    %16 = vector.extract_strided_slice %14 {offsets = [0, 1], sizes = [24, 128], strides = [1, 1]} : vector<24x135xf32> to vector<24x128xf32>
    %17 = vector.extract_strided_slice %14 {offsets = [0, 2], sizes = [24, 128], strides = [1, 1]} : vector<24x135xf32> to vector<24x128xf32>
    %18 = vector.extract_strided_slice %14 {offsets = [0, 3], sizes = [24, 128], strides = [1, 1]} : vector<24x135xf32> to vector<24x128xf32>
    %19 = vector.extract_strided_slice %14 {offsets = [0, 4], sizes = [24, 128], strides = [1, 1]} : vector<24x135xf32> to vector<24x128xf32>
    %20 = vector.extract_strided_slice %14 {offsets = [0, 5], sizes = [24, 128], strides = [1, 1]} : vector<24x135xf32> to vector<24x128xf32>
    %21 = vector.extract_strided_slice %14 {offsets = [0, 6], sizes = [24, 128], strides = [1, 1]} : vector<24x135xf32> to vector<24x128xf32>
    %22 = vector.extract_strided_slice %14 {offsets = [0, 7], sizes = [24, 128], strides = [1, 1]} : vector<24x135xf32> to vector<24x128xf32>
    %23 = tpu.concatenate %15, %16, %17, %18, %19, %20, %21, %22 in 0 : vector<24x128xf32>, vector<24x128xf32>, vector<24x128xf32>, vector<24x128xf32>, vector<24x128xf32>, vector<24x128xf32>, vector<24x128xf32>, vector<24x128xf32> -> vector<192x128xf32>
    %c1_17 = arith.constant 1 : index
    %c0_18 = arith.constant 0 : index
    %c0_19 = arith.constant 0 : index
    %24 = vector.load %arg9[%c1_17, %c0_18, %c0_19] : memref<2x24x135xf32, #tpu.memory_space<vmem>>, vector<1x24x135xf32>
    %25 = vector.shape_cast %24 : vector<1x24x135xf32> to vector<24x135xf32>
    %26 = vector.extract_strided_slice %25 {offsets = [0, 0], sizes = [24, 128], strides = [1, 1]} : vector<24x135xf32> to vector<24x128xf32>
    %27 = vector.extract_strided_slice %25 {offsets = [0, 1], sizes = [24, 128], strides = [1, 1]} : vector<24x135xf32> to vector<24x128xf32>
    %28 = vector.extract_strided_slice %25 {offsets = [0, 2], sizes = [24, 128], strides = [1, 1]} : vector<24x135xf32> to vector<24x128xf32>
    %29 = vector.extract_strided_slice %25 {offsets = [0, 3], sizes = [24, 128], strides = [1, 1]} : vector<24x135xf32> to vector<24x128xf32>
    %30 = vector.extract_strided_slice %25 {offsets = [0, 4], sizes = [24, 128], strides = [1, 1]} : vector<24x135xf32> to vector<24x128xf32>
    %31 = vector.extract_strided_slice %25 {offsets = [0, 5], sizes = [24, 128], strides = [1, 1]} : vector<24x135xf32> to vector<24x128xf32>
    %32 = vector.extract_strided_slice %25 {offsets = [0, 6], sizes = [24, 128], strides = [1, 1]} : vector<24x135xf32> to vector<24x128xf32>
    %33 = vector.extract_strided_slice %25 {offsets = [0, 7], sizes = [24, 128], strides = [1, 1]} : vector<24x135xf32> to vector<24x128xf32>
    %34 = tpu.concatenate %26, %27, %28, %29, %30, %31, %32, %33 in 0 : vector<24x128xf32>, vector<24x128xf32>, vector<24x128xf32>, vector<24x128xf32>, vector<24x128xf32>, vector<24x128xf32>, vector<24x128xf32>, vector<24x128xf32> -> vector<192x128xf32>
    %35 = tpu.concatenate %23, %34 in 1 : vector<192x128xf32>, vector<192x128xf32> -> vector<192x256xf32>
    %c0_20 = arith.constant 0 : index
    %c0_21 = arith.constant 0 : index
    %36 = vector.load %arg1[%c0_20, %c0_21] : memref<8x192xf32, #tpu.memory_space<vmem>>, vector<8x192xf32>
    %cst_22 = arith.constant dense<0.000000e+00> : vector<8x256xf32>
    %37 = tpu.matmul %36, %35, %cst_22 {dimension_numbers = #tpu.dot_dimension_numbers<[1], [0], [0], [1], [0, 0, 1, 1], [], []>} : vector<8x192xf32>, vector<192x256xf32>, vector<8x256xf32> -> vector<8x256xf32>
    %cst_23 = arith.constant dense<0.000000e+00> : vector<8xf32>
    %38 = vector.multi_reduction <add>, %37, %cst_23 [1] : vector<8x256xf32> to vector<8xf32>
    %39 = vector.shape_cast %38 : vector<8xf32> to vector<8x1xf32>
    %cst_24 = arith.constant 2.560000e+02 : f32
    %40 = vector.broadcast %cst_24 : f32 to vector<8x1xf32>
    %41 = arith.divf %39, %40 : vector<8x1xf32>
    %42 = arith.mulf %37, %37 : vector<8x256xf32>
    %cst_25 = arith.constant dense<0.000000e+00> : vector<8xf32>
    %43 = vector.multi_reduction <add>, %42, %cst_25 [1] : vector<8x256xf32> to vector<8xf32>
    %44 = vector.shape_cast %43 : vector<8xf32> to vector<8x1xf32>
    %cst_26 = arith.constant 2.560000e+02 : f32
    %45 = vector.broadcast %cst_26 : f32 to vector<8x1xf32>
    %46 = arith.divf %44, %45 : vector<8x1xf32>
    %47 = arith.mulf %41, %41 : vector<8x1xf32>
    %48 = arith.subf %46, %47 : vector<8x1xf32>
    %cst_27 = arith.constant 9.99999974E-6 : f32
    %49 = vector.broadcast %cst_27 : f32 to vector<8x1xf32>
    %50 = arith.addf %48, %49 : vector<8x1xf32>
    %51 = math.rsqrt %50 : vector<8x1xf32>
    %c0_28 = arith.constant 0 : index
    %c0_29 = arith.constant 0 : index
    %52 = vector.load %arg2[%c0_28, %c0_29] : memref<8x1xf32, #tpu.memory_space<vmem>>, vector<8x1xf32>
    %53 = arith.mulf %51, %52 : vector<8x1xf32>
    %c0_30 = arith.constant 0 : index
    %c0_31 = arith.constant 0 : index
    %54 = vector.load %arg3[%c0_30, %c0_31] : memref<8x1xf32, #tpu.memory_space<vmem>>, vector<8x1xf32>
    %55 = arith.mulf %41, %53 : vector<8x1xf32>
    %56 = arith.subf %54, %55 : vector<8x1xf32>
    %57 = vector.broadcast %53 : vector<8x1xf32> to vector<8x256xf32>
    %58 = arith.mulf %37, %57 : vector<8x256xf32>
    %59 = vector.broadcast %56 : vector<8x1xf32> to vector<8x256xf32>
    %60 = arith.addf %58, %59 : vector<8x256xf32>
    %cst_32 = arith.constant 0.000000e+00 : f32
    %61 = vector.broadcast %cst_32 : f32 to vector<8x256xf32>
    %62 = arith.cmpf oge, %60, %61 : vector<8x256xf32>
    %63 = vector.broadcast %0 : f32 to vector<8x256xf32>
    %64 = arith.mulf %63, %60 : vector<8x256xf32>
    %65 = arith.select %62, %60, %64 : vector<8x256xi1>, vector<8x256xf32>
    %cst_33 = arith.constant 0.000000e+00 : f32
    %66 = vector.broadcast %cst_33 : f32 to vector<2x8x135xf32>
    %c0_34 = arith.constant 0 : index
    %c0_35 = arith.constant 0 : index
    %c0_36 = arith.constant 0 : index
    %67 = vector.load %arg10[%c0_34, %c0_35, %c0_36] : memref<2x8x135xf32, #tpu.memory_space<vmem>>, vector<2x8x135xf32>
    tpu.vector_store %arg10[%c0_34, %c0_35, %c0_36], %66 {strides = array<i32>} : memref<2x8x135xf32, #tpu.memory_space<vmem>>, vector<2x8x135xf32>,
    %68 = vector.extract_strided_slice %65 {offsets = [0, 0], sizes = [8, 128], strides = [1, 1]} : vector<8x256xf32> to vector<8x128xf32>
    %c0_37 = arith.constant 0 : index
    %c0_38 = arith.constant 0 : index
    %c4_39 = arith.constant 4 : index
    %69 = vector.load %arg10[%c0_37, %c0_38, %c4_39] : memref<2x8x135xf32, #tpu.memory_space<vmem>>, vector<1x8x128xf32>
    %70 = vector.shape_cast %69 : vector<1x8x128xf32> to vector<8x128xf32>
    %71 = vector.shape_cast %68 : vector<8x128xf32> to vector<1x8x128xf32>
    tpu.vector_store %arg10[%c0_37, %c0_38, %c4_39], %71 {strides = array<i32>} : memref<2x8x135xf32, #tpu.memory_space<vmem>>, vector<1x8x128xf32>,
    %72 = vector.extract_strided_slice %65 {offsets = [0, 128], sizes = [8, 128], strides = [1, 1]} : vector<8x256xf32> to vector<8x128xf32>
    %c1_40 = arith.constant 1 : index
    %c0_41 = arith.constant 0 : index
    %c4_42 = arith.constant 4 : index
    %73 = vector.load %arg10[%c1_40, %c0_41, %c4_42] : memref<2x8x135xf32, #tpu.memory_space<vmem>>, vector<1x8x128xf32>
    %74 = vector.shape_cast %73 : vector<1x8x128xf32> to vector<8x128xf32>
    %75 = vector.shape_cast %72 : vector<8x128xf32> to vector<1x8x128xf32>
    tpu.vector_store %arg10[%c1_40, %c0_41, %c4_42], %75 {strides = array<i32>} : memref<2x8x135xf32, #tpu.memory_space<vmem>>, vector<1x8x128xf32>,
    %c0_43 = arith.constant 0 : index
    %c0_44 = arith.constant 0 : index
    %c0_45 = arith.constant 0 : index
    %76 = vector.load %arg10[%c0_43, %c0_44, %c0_45] : memref<2x8x135xf32, #tpu.memory_space<vmem>>, vector<1x8x135xf32>
    %77 = vector.shape_cast %76 : vector<1x8x135xf32> to vector<8x135xf32>
    %78 = vector.extract_strided_slice %77 {offsets = [0, 0], sizes = [8, 128], strides = [1, 1]} : vector<8x135xf32> to vector<8x128xf32>
    %79 = vector.extract_strided_slice %77 {offsets = [0, 1], sizes = [8, 128], strides = [1, 1]} : vector<8x135xf32> to vector<8x128xf32>
    %80 = vector.extract_strided_slice %77 {offsets = [0, 2], sizes = [8, 128], strides = [1, 1]} : vector<8x135xf32> to vector<8x128xf32>
    %81 = vector.extract_strided_slice %77 {offsets = [0, 3], sizes = [8, 128], strides = [1, 1]} : vector<8x135xf32> to vector<8x128xf32>
    %82 = vector.extract_strided_slice %77 {offsets = [0, 4], sizes = [8, 128], strides = [1, 1]} : vector<8x135xf32> to vector<8x128xf32>
    %83 = vector.extract_strided_slice %77 {offsets = [0, 5], sizes = [8, 128], strides = [1, 1]} : vector<8x135xf32> to vector<8x128xf32>
    %84 = vector.extract_strided_slice %77 {offsets = [0, 6], sizes = [8, 128], strides = [1, 1]} : vector<8x135xf32> to vector<8x128xf32>
    %85 = vector.extract_strided_slice %77 {offsets = [0, 7], sizes = [8, 128], strides = [1, 1]} : vector<8x135xf32> to vector<8x128xf32>
    %86 = tpu.concatenate %78, %79, %80, %81, %82, %83, %84, %85 in 0 : vector<8x128xf32>, vector<8x128xf32>, vector<8x128xf32>, vector<8x128xf32>, vector<8x128xf32>, vector<8x128xf32>, vector<8x128xf32>, vector<8x128xf32> -> vector<64x128xf32>
    %c1_46 = arith.constant 1 : index
    %c0_47 = arith.constant 0 : index
    %c0_48 = arith.constant 0 : index
    %87 = vector.load %arg10[%c1_46, %c0_47, %c0_48] : memref<2x8x135xf32, #tpu.memory_space<vmem>>, vector<1x8x135xf32>
    %88 = vector.shape_cast %87 : vector<1x8x135xf32> to vector<8x135xf32>
    %89 = vector.extract_strided_slice %88 {offsets = [0, 0], sizes = [8, 128], strides = [1, 1]} : vector<8x135xf32> to vector<8x128xf32>
    %90 = vector.extract_strided_slice %88 {offsets = [0, 1], sizes = [8, 128], strides = [1, 1]} : vector<8x135xf32> to vector<8x128xf32>
    %91 = vector.extract_strided_slice %88 {offsets = [0, 2], sizes = [8, 128], strides = [1, 1]} : vector<8x135xf32> to vector<8x128xf32>
    %92 = vector.extract_strided_slice %88 {offsets = [0, 3], sizes = [8, 128], strides = [1, 1]} : vector<8x135xf32> to vector<8x128xf32>
    %93 = vector.extract_strided_slice %88 {offsets = [0, 4], sizes = [8, 128], strides = [1, 1]} : vector<8x135xf32> to vector<8x128xf32>
    %94 = vector.extract_strided_slice %88 {offsets = [0, 5], sizes = [8, 128], strides = [1, 1]} : vector<8x135xf32> to vector<8x128xf32>
    %95 = vector.extract_strided_slice %88 {offsets = [0, 6], sizes = [8, 128], strides = [1, 1]} : vector<8x135xf32> to vector<8x128xf32>
    %96 = vector.extract_strided_slice %88 {offsets = [0, 7], sizes = [8, 128], strides = [1, 1]} : vector<8x135xf32> to vector<8x128xf32>
    %97 = tpu.concatenate %89, %90, %91, %92, %93, %94, %95, %96 in 0 : vector<8x128xf32>, vector<8x128xf32>, vector<8x128xf32>, vector<8x128xf32>, vector<8x128xf32>, vector<8x128xf32>, vector<8x128xf32>, vector<8x128xf32> -> vector<64x128xf32>
    %98 = tpu.concatenate %86, %97 in 1 : vector<64x128xf32>, vector<64x128xf32> -> vector<64x256xf32>
    %c0_49 = arith.constant 0 : index
    %c0_50 = arith.constant 0 : index
    %99 = vector.load %arg4[%c0_49, %c0_50] : memref<8x64xf32, #tpu.memory_space<vmem>>, vector<8x64xf32>
    %cst_51 = arith.constant dense<0.000000e+00> : vector<8x256xf32>
    %100 = tpu.matmul %99, %98, %cst_51 {dimension_numbers = #tpu.dot_dimension_numbers<[1], [0], [0], [1], [0, 0, 1, 1], [], []>} : vector<8x64xf32>, vector<64x256xf32>, vector<8x256xf32> -> vector<8x256xf32>
    %cst_52 = arith.constant dense<0.000000e+00> : vector<8xf32>
    %101 = vector.multi_reduction <add>, %100, %cst_52 [1] : vector<8x256xf32> to vector<8xf32>
    %102 = vector.shape_cast %101 : vector<8xf32> to vector<8x1xf32>
    %cst_53 = arith.constant 2.560000e+02 : f32
    %103 = vector.broadcast %cst_53 : f32 to vector<8x1xf32>
    %104 = arith.divf %102, %103 : vector<8x1xf32>
    %105 = arith.mulf %100, %100 : vector<8x256xf32>
    %cst_54 = arith.constant dense<0.000000e+00> : vector<8xf32>
    %106 = vector.multi_reduction <add>, %105, %cst_54 [1] : vector<8x256xf32> to vector<8xf32>
    %107 = vector.shape_cast %106 : vector<8xf32> to vector<8x1xf32>
    %cst_55 = arith.constant 2.560000e+02 : f32
    %108 = vector.broadcast %cst_55 : f32 to vector<8x1xf32>
    %109 = arith.divf %107, %108 : vector<8x1xf32>
    %110 = arith.mulf %104, %104 : vector<8x1xf32>
    %111 = arith.subf %109, %110 : vector<8x1xf32>
    %cst_56 = arith.constant 9.99999974E-6 : f32
    %112 = vector.broadcast %cst_56 : f32 to vector<8x1xf32>
    %113 = arith.addf %111, %112 : vector<8x1xf32>
    %114 = math.rsqrt %113 : vector<8x1xf32>
    %c0_57 = arith.constant 0 : index
    %c0_58 = arith.constant 0 : index
    %115 = vector.load %arg5[%c0_57, %c0_58] : memref<8x1xf32, #tpu.memory_space<vmem>>, vector<8x1xf32>
    %116 = arith.mulf %114, %115 : vector<8x1xf32>
    %c0_59 = arith.constant 0 : index
    %c0_60 = arith.constant 0 : index
    %117 = vector.load %arg6[%c0_59, %c0_60] : memref<8x1xf32, #tpu.memory_space<vmem>>, vector<8x1xf32>
    %118 = arith.mulf %104, %116 : vector<8x1xf32>
    %119 = arith.subf %117, %118 : vector<8x1xf32>
    %120 = vector.broadcast %116 : vector<8x1xf32> to vector<8x256xf32>
    %121 = arith.mulf %100, %120 : vector<8x256xf32>
    %122 = vector.broadcast %119 : vector<8x1xf32> to vector<8x256xf32>
    %123 = arith.addf %121, %122 : vector<8x256xf32>
    %cst_61 = arith.constant 0.000000e+00 : f32
    %124 = vector.broadcast %cst_61 : f32 to vector<8x256xf32>
    %125 = arith.cmpf oge, %123, %124 : vector<8x256xf32>
    %126 = vector.broadcast %0 : f32 to vector<8x256xf32>
    %127 = arith.mulf %126, %123 : vector<8x256xf32>
    %128 = arith.select %125, %123, %127 : vector<8x256xi1>, vector<8x256xf32>
    %129 = vector.extract_strided_slice %128 {offsets = [0, 0], sizes = [8, 128], strides = [1, 1]} : vector<8x256xf32> to vector<8x128xf32>
    %c0_62 = arith.constant 0 : index
    %c0_63 = arith.constant 0 : index
    %c0_64 = arith.constant 0 : index
    %130 = vector.load %arg8[%c0_62, %c0_63, %c0_64] : memref<2x8x128xf32, #tpu.memory_space<vmem>>, vector<1x8x128xf32>
    %131 = vector.shape_cast %130 : vector<1x8x128xf32> to vector<8x128xf32>
    %132 = vector.shape_cast %129 : vector<8x128xf32> to vector<1x8x128xf32>
    tpu.vector_store %arg8[%c0_62, %c0_63, %c0_64], %132 {strides = array<i32>} : memref<2x8x128xf32, #tpu.memory_space<vmem>>, vector<1x8x128xf32>,
    %133 = vector.extract_strided_slice %128 {offsets = [0, 128], sizes = [8, 128], strides = [1, 1]} : vector<8x256xf32> to vector<8x128xf32>
    %c1_65 = arith.constant 1 : index
    %c0_66 = arith.constant 0 : index
    %c0_67 = arith.constant 0 : index
    %134 = vector.load %arg8[%c1_65, %c0_66, %c0_67] : memref<2x8x128xf32, #tpu.memory_space<vmem>>, vector<1x8x128xf32>
    %135 = vector.shape_cast %134 : vector<1x8x128xf32> to vector<8x128xf32>
    %136 = vector.shape_cast %133 : vector<8x128xf32> to vector<1x8x128xf32>
    tpu.vector_store %arg8[%c1_65, %c0_66, %c0_67], %136 {strides = array<i32>} : memref<2x8x128xf32, #tpu.memory_space<vmem>>, vector<1x8x128xf32>,
    return
  }
}

</mosaic_0001>

<llo_original>
// kernel: decode_stage_forward.2
$region0: #{decode_stage_forward.2}
  #allocation0 [shape = 'u32[]', space=smem, size = 0x4, offset = 0x4, fixed_abs, tag = 'smem constant byte address 0x4 - core index']
  #allocation1 [shape = 'u32[144,128]{1,0:T(1,128)}', space=vmem, size = 0x12000, scoped, tag = 'internal scratch']
  #allocation2 [shape = 'f32[2,16,68]{2,1,0:T(8,128)}', space=vmem, size = 0x4000, scoped, tag = 'scratch operand']
  #allocation3 [shape = 'f32[1,1]{1,0:T(1,128)S(6)}', space=smem, size = 0x200, scoped, tag = 'scoped memory for decode_stage_forward.2']
  %s0 = inlined_call_operand.vmem [shape: f32[2,16,64], index: 0, kind: input, shape index: {}]
  %s1 = inlined_call_operand.vmem [shape: f32[16,64], index: 1, kind: input, shape index: {}]
  %s2 = inlined_call_operand.vmem [shape: f32[16,64], index: 2, kind: input, shape index: {}]
  %s3 = inlined_call_operand.vmem [shape: f32[16,1], index: 3, kind: input, shape index: {}]
  %s4 = inlined_call_operand.vmem [shape: f32[16,1], index: 4, kind: input, shape index: {}]
  %s5 = inlined_call_operand.<no memory space> [shape: f32[1,1], index: 5, kind: input, shape index: {}]
  %s6 = inlined_call_operand.vmem [shape: f32[4,16,64], index: 6, kind: output, shape index: {}]
  %s7 = sld [smem:[#allocation0]]
  $region34: #{decode_stage_forward.2} parent=0
    _
  %s9 = ssub.s32 1, %s7
  %s10 = scalar_select 0, %s9, %s7
  %11 = sst [smem:[#allocation3]] %s5
  // Predicated region
  $region2: #{decode_stage_forward.2} parent=0 // pred_check
    _
  $region3: #{decode_stage_forward.2} parent=0 // pred_check_branch
    %13 = sbr.rel (0) target = $region5
  $region4: #{decode_stage_forward.2} parent=0 // pred_region
    _
  $region5: #{decode_stage_forward.2} parent=0 // pred_fallthru
    _
  // Predicated region
  $region6: #{decode_stage_forward.2} parent=0 // pred_check
    _
  $region7: #{decode_stage_forward.2} parent=0 // pred_check_branch
    %15 = sbr.rel (0) target = $region9
  $region8: #{decode_stage_forward.2} parent=0 // pred_region
    _
  $region9: #{decode_stage_forward.2} parent=0 // pred_fallthru
    _
  // Predicated region
  $region10: #{decode_stage_forward.2} parent=0 // pred_check
    _
  $region11: #{decode_stage_forward.2} parent=0 // pred_check_branch
    %17 = sbr.rel (0) target = $region13
  $region12: #{decode_stage_forward.2} parent=0 // pred_region
    _
  $region13: #{decode_stage_forward.2} parent=0 // pred_fallthru
    _
  // Predicated region
  $region14: #{decode_stage_forward.2} parent=0 // pred_check
    _
  $region15: #{decode_stage_forward.2} parent=0 // pred_check_branch
    %19 = sbr.rel (0) target = $region17
  $region16: #{decode_stage_forward.2} parent=0 // pred_region
    _
  $region17: #{decode_stage_forward.2} parent=0 // pred_fallthru
    _
  // Predicated region
  $region18: #{decode_stage_forward.2} parent=0 // pred_check
    _
  $region19: #{decode_stage_forward.2} parent=0 // pred_check_branch
    %21 = sbr.rel (0) target = $region21
  $region20: #{decode_stage_forward.2} parent=0 // pred_region
    _
  $region21: #{decode_stage_forward.2} parent=0 // pred_fallthru
    _
  // Predicated region
  $region22: #{decode_stage_forward.2} parent=0 // pred_check
    _
  $region23: #{decode_stage_forward.2} parent=0 // pred_check_branch
    %23 = sbr.rel (0) target = $region25
  $region24: #{decode_stage_forward.2} parent=0 // pred_region
    _
  $region25: #{decode_stage_forward.2} parent=0 // pred_fallthru
    _
  %s24 = sld [smem:[#allocation3]]
  %vm25 = vcmask 556032
  %26 = vst.msk [vmem:[#allocation2] sm:$0xff] %vm25, 0.0
  %27 = vst.msk [vmem:[#allocation2 + $0x8] sm:$0xff] %vm25, 0.0
  %28 = vst.msk [vmem:[#allocation2 + $0x10] sm:$0xff] %vm25, 0.0
  %29 = vst.msk [vmem:[#allocation2 + $0x18] sm:$0xff] %vm25, 0.0
  %v30 = vld [vmem:[%s0] sm:$0xff]
  %v31 = vld [vmem:[%s0 + $0x8] sm:$0xff]
  %34 = vrot.lane.b32.xlu0 %v30, 2
  %v35 = vpop.permute.xlu0 %34
  %36 = vrot.lane.b32.xlu0 %v31, 2
  %v37 = vpop.permute.xlu0 %36
  %vm40 = vcmask 539664
  %41 = vst.msk [vmem:[#allocation2] sm:$0xff] %vm40, %v35
  %42 = vst.msk [vmem:[#allocation2 + $0x8] sm:$0xff] %vm40, %v37
  %s43 = scalar_lea.vmem %s0, 16
  %v44 = vld [vmem:[%s43] sm:$0xff]
  %v45 = vld [vmem:[%s43 + $0x8] sm:$0xff]
  %48 = vrot.lane.b32.xlu0 %v44, 2
  %v49 = vpop.permute.xlu0 %48
  %50 = vrot.lane.b32.xlu0 %v45, 2
  %v51 = vpop.permute.xlu0 %50
  %s54 = scalar_lea.vmem [#allocation2], 16
  %55 = vst.msk [vmem:[%s54] sm:$0xff] %vm40, %v49
  %56 = vst.msk [vmem:[%s54 + $0x8] sm:$0xff] %vm40, %v51
  %v57 = vld [vmem:[%s1] sm:$0xff]
  %v58 = vld [vmem:[%s1 + $0x8] sm:$0xff]
  %v59 = vld [vmem:[#allocation2] sm:$0xff]
  %v60 = vld [vmem:[#allocation2 + $0x8] sm:$0xff]
  %63 = vrot.lane.b32.xlu0 %v59, 127
  %v64 = vpop.permute.xlu0 %63
  %65 = vrot.lane.b32.xlu0 %v60, 127
  %v66 = vpop.permute.xlu0 %65
  %69 = vrot.lane.b32.xlu0 %v59, 126
  %v70 = vpop.permute.xlu0 %69
  %71 = vrot.lane.b32.xlu0 %v60, 126
  %v72 = vpop.permute.xlu0 %71
  %75 = vrot.lane.b32.xlu0 %v59, 125
  %v76 = vpop.permute.xlu0 %75
  %77 = vrot.lane.b32.xlu0 %v60, 125
  %v78 = vpop.permute.xlu0 %77
  %v81 = vld [vmem:[%s54] sm:$0xff]
  %v82 = vld [vmem:[%s54 + $0x8] sm:$0xff]
  %85 = vrot.lane.b32.xlu0 %v81, 127
  %v86 = vpop.permute.xlu0 %85
  %87 = vrot.lane.b32.xlu0 %v82, 127
  %v88 = vpop.permute.xlu0 %87
  %89 = vrot.lane.b32.xlu0 %v81, 126
  %v90 = vpop.permute.xlu0 %89
  %91 = vrot.lane.b32.xlu0 %v82, 126
  %v92 = vpop.permute.xlu0 %91
  %93 = vrot.lane.b32.xlu0 %v81, 125
  %v94 = vpop.permute.xlu0 %93
  %95 = vrot.lane.b32.xlu0 %v82, 125
  %v96 = vpop.permute.xlu0 %95
  %97 = vrot.lane.b32.xlu0 %v81, 64
  %v98 = vpop.permute.xlu0 %97
  %99 = vrot.lane.b32.xlu0 %v82, 64
  %v100 = vpop.permute.xlu0 %99
  %101 = vrot.lane.b32.xlu0 %v86, 64
  %v102 = vpop.permute.xlu0 %101
  %103 = vrot.lane.b32.xlu0 %v88, 64
  %v104 = vpop.permute.xlu0 %103
  %105 = vrot.lane.b32.xlu0 %v90, 64
  %v106 = vpop.permute.xlu0 %105
  %107 = vrot.lane.b32.xlu0 %v92, 64
  %v108 = vpop.permute.xlu0 %107
  %109 = vrot.lane.b32.xlu0 %v94, 64
  %v110 = vpop.permute.xlu0 %109
  %111 = vrot.lane.b32.xlu0 %v96, 64
  %v112 = vpop.permute.xlu0 %111
  %vm121 = vcmask 523264
  %v122 = vsel %vm121, %v59, %v98
  %v123 = vsel %vm121, %v60, %v100
  %v124 = vsel %vm121, %v64, %v102
  %v125 = vsel %vm121, %v66, %v104
  %v126 = vsel %vm121, %v70, %v106
  %v127 = vsel %vm121, %v72, %v108
  %v128 = vsel %vm121, %v76, %v110
  %v129 = vsel %vm121, %v78, %v112
  %v131 = vsel %vm121, %v57, 0
  %v134 = vsel %vm121, %v58, 0
  %136 = vmatprep.subr.mxu0 0.0
  %137 = vmatpush1.msra.mxu0 %v122
  %138 = vmatprep.subr.mxu0 0.0
  %139 = vmatpush1.msra.mxu0 %v123
  %140 = vmatprep.subr.mxu0 0.0
  %141 = vmatpush1.msra.mxu0 %v124
  %142 = vmatprep.subr.mxu0 0.0
  %143 = vmatpush1.msra.mxu0 %v125
  %144 = vmatprep.subr.mxu0 0.0
  %145 = vmatpush1.msra.mxu0 %v126
  %146 = vmatprep.subr.mxu0 0.0
  %147 = vmatpush1.msra.mxu0 %v127
  %148 = vmatprep.subr.mxu0 0.0
  %149 = vmatpush1.msra.mxu0 %v128
  %150 = vmatprep.subr.mxu0 0.0
  %151 = vmatpush1.msra.mxu0 %v129
  %152 = vmatprep.subr.mxu0 0.0
  %153 = vmatpush1.msra.mxu0 0.0
  %154 = vmatprep.subr.mxu0 0.0
  %155 = vmatpush1.msra.mxu0 0.0
  %156 = vmatprep.subr.mxu0 0.0
  %157 = vmatpush1.msra.mxu0 0.0
  %158 = vmatprep.subr.mxu0 0.0
  %159 = vmatpush1.msra.mxu0 0.0
  %160 = vmatprep.subr.mxu0 0.0
  %161 = vmatpush1.msra.mxu0 0.0
  %162 = vmatprep.subr.mxu0 0.0
  %163 = vmatpush1.msra.mxu0 0.0
  %164 = vmatprep.subr.mxu0 0.0
  %165 = vmatpush1.msra.mxu0 0.0
  %166 = vmatprep.subr.mxu0 0.0
  %167 = vmatpush1.msra.mxu0 0.0
  %168 = vmatprep.subr.mxu0 0.0
  %169 = vmatpush1.msra.mxu0 0.0
  %170 = vmatprep.subr.mxu0 0.0
  %171 = vmatpush1.msra.mxu0 0.0
  %172 = vmatprep.subr.mxu0 0.0
  %173 = vmatpush1.msra.mxu0 0.0
  %174 = vmatprep.subr.mxu0 0.0
  %175 = vmatpush1.msra.mxu0 0.0
  %176 = vmatprep.subr.mxu0 0.0
  %177 = vmatpush1.msra.mxu0 0.0
  %178 = vmatprep.subr.mxu0 0.0
  %179 = vmatpush1.msra.mxu0 0.0
  %180 = vmatprep.subr.mxu0 0.0
  %181 = vmatpush1.msra.mxu0 0.0
  %182 = vmatprep.subr.mxu0 0.0
  %183 = vmatpush1.msra.mxu0 0.0
  %184 = vmatprep.subr.mxu0 0.0
  %185 = vmatpush1.msra.mxu0 0.0
  %186 = vmatprep.subr.mxu0 0.0
  %187 = vmatpush1.msra.mxu0 0.0
  %188 = vmatprep.subr.mxu0 0.0
  %189 = vmatpush1.msra.mxu0 0.0
  %190 = vmatprep.subr.mxu0 0.0
  %191 = vmatpush1.msra.mxu0 0.0
  %192 = vmatprep.subr.mxu0 0.0
  %193 = vmatpush1.msra.mxu0 0.0
  %194 = vmatprep.subr.mxu0 0.0
  %195 = vmatpush1.msra.mxu0 0.0
  %196 = vmatprep.subr.mxu0 0.0
  %197 = vmatpush1.msra.mxu0 0.0
  %198 = vmatprep.subr.mxu0 0.0
  %199 = vmatpush1.msra.mxu0 0.0
  %200 = vmatprep.mubr.f32.mxu0 0.0
  %201 = vmatmul.mubr.f32.gmra.mrb[0].mxu0 %v131
  %v202 = vpop.f32.mrb[0].mxu0
  %v203 = vadd.f32 0.0, %v202
  %v204 = vpop.f32.mrb[0].mxu0
  %205 = vmatprep.mubr.f32.mxu0 0.0
  %206 = vmatmul.mubr.f32.gmra.mrb[0].mxu0 %v134
  %v207 = vpop.f32.mrb[0].mxu0
  %v208 = vadd.f32 0.0, %v207
  %v209 = vpop.f32.mrb[0].mxu0
  %210 = vdwg.mxu0
  %v211 = vld [vmem:[%s2] sm:$0xff]
  %v212 = vld [vmem:[%s2 + $0x8] sm:$0xff]
  %213 = vrot.lane.b32.xlu0 %v64, 127
  %v214 = vpop.permute.xlu0 %213
  %215 = vrot.lane.b32.xlu0 %v66, 127
  %v216 = vpop.permute.xlu0 %215
  %217 = vrot.lane.b32.xlu0 %v70, 127
  %v218 = vpop.permute.xlu0 %217
  %219 = vrot.lane.b32.xlu0 %v72, 127
  %v220 = vpop.permute.xlu0 %219
  %221 = vrot.lane.b32.xlu0 %v76, 127
  %v222 = vpop.permute.xlu0 %221
  %223 = vrot.lane.b32.xlu0 %v78, 127
  %v224 = vpop.permute.xlu0 %223
  %231 = vrot.lane.b32.xlu0 %v81, 63
  %v232 = vpop.permute.xlu0 %231
  %233 = vrot.lane.b32.xlu0 %v82, 63
  %v234 = vpop.permute.xlu0 %233
  %235 = vrot.lane.b32.xlu0 %v86, 63
  %v236 = vpop.permute.xlu0 %235
  %237 = vrot.lane.b32.xlu0 %v88, 63
  %v238 = vpop.permute.xlu0 %237
  %239 = vrot.lane.b32.xlu0 %v90, 63
  %v240 = vpop.permute.xlu0 %239
  %241 = vrot.lane.b32.xlu0 %v92, 63
  %v242 = vpop.permute.xlu0 %241
  %243 = vrot.lane.b32.xlu0 %v94, 63
  %v244 = vpop.permute.xlu0 %243
  %245 = vrot.lane.b32.xlu0 %v96, 63
  %v246 = vpop.permute.xlu0 %245
  %v255 = vsel %vm121, %v64, %v232
  %v256 = vsel %vm121, %v66, %v234
  %v257 = vsel %vm121, %v214, %v236
  %v258 = vsel %vm121, %v216, %v238
  %v259 = vsel %vm121, %v218, %v240
  %v260 = vsel %vm121, %v220, %v242
  %v261 = vsel %vm121, %v222, %v244
  %v262 = vsel %vm121, %v224, %v246
  %v264 = vsel %vm121, %v211, 0
  %v267 = vsel %vm121, %v212, 0
  %269 = vmatprep.subr.mxu0 0.0
  %270 = vmatpush1.msra.mxu0 %v255
  %271 = vmatprep.subr.mxu0 0.0
  %272 = vmatpush1.msra.mxu0 %v256
  %273 = vmatprep.subr.mxu0 0.0
  %274 = vmatpush1.msra.mxu0 %v257
  %275 = vmatprep.subr.mxu0 0.0
  %276 = vmatpush1.msra.mxu0 %v258
  %277 = vmatprep.subr.mxu0 0.0
  %278 = vmatpush1.msra.mxu0 %v259
  %279 = vmatprep.subr.mxu0 0.0
  %280 = vmatpush1.msra.mxu0 %v260
  %281 = vmatprep.subr.mxu0 0.0
  %282 = vmatpush1.msra.mxu0 %v261
  %283 = vmatprep.subr.mxu0 0.0
  %284 = vmatpush1.msra.mxu0 %v262
  %285 = vmatprep.subr.mxu0 0.0
  %286 = vmatpush1.msra.mxu0 0.0
  %287 = vmatprep.subr.mxu0 0.0
  %288 = vmatpush1.msra.mxu0 0.0
  %289 = vmatprep.subr.mxu0 0.0
  %290 = vmatpush1.msra.mxu0 0.0
  %291 = vmatprep.subr.mxu0 0.0
  %292 = vmatpush1.msra.mxu0 0.0
  %293 = vmatprep.subr.mxu0 0.0
  %294 = vmatpush1.msra.mxu0 0.0
  %295 = vmatprep.subr.mxu0 0.0
  %296 = vmatpush1.msra.mxu0 0.0
  %297 = vmatprep.subr.mxu0 0.0
  %298 = vmatpush1.msra.mxu0 0.0
  %299 = vmatprep.subr.mxu0 0.0
  %300 = vmatpush1.msra.mxu0 0.0
  %301 = vmatprep.subr.mxu0 0.0
  %302 = vmatpush1.msra.mxu0 0.0
  %303 = vmatprep.subr.mxu0 0.0
  %304 = vmatpush1.msra.mxu0 0.0
  %305 = vmatprep.subr.mxu0 0.0
  %306 = vmatpush1.msra.mxu0 0.0
  %307 = vmatprep.subr.mxu0 0.0
  %308 = vmatpush1.msra.mxu0 0.0
  %309 = vmatprep.subr.mxu0 0.0
  %310 = vmatpush1.msra.mxu0 0.0
  %311 = vmatprep.subr.mxu0 0.0
  %312 = vmatpush1.msra.mxu0 0.0
  %313 = vmatprep.subr.mxu0 0.0
  %314 = vmatpush1.msra.mxu0 0.0
  %315 = vmatprep.subr.mxu0 0.0
  %316 = vmatpush1.msra.mxu0 0.0
  %317 = vmatprep.subr.mxu0 0.0
  %318 = vmatpush1.msra.mxu0 0.0
  %319 = vmatprep.subr.mxu0 0.0
  %320 = vmatpush1.msra.mxu0 0.0
  %321 = vmatprep.subr.mxu0 0.0
  %322 = vmatpush1.msra.mxu0 0.0
  %323 = vmatprep.subr.mxu0 0.0
  %324 = vmatpush1.msra.mxu0 0.0
  %325 = vmatprep.subr.mxu0 0.0
  %326 = vmatpush1.msra.mxu0 0.0
  %327 = vmatprep.subr.mxu0 0.0
  %328 = vmatpush1.msra.mxu0 0.0
  %329 = vmatprep.subr.mxu0 0.0
  %330 = vmatpush1.msra.mxu0 0.0
  %331 = vmatprep.subr.mxu0 0.0
  %332 = vmatpush1.msra.mxu0 0.0
  %333 = vmatprep.mubr.f32.mxu0 0.0
  %334 = vmatmul.mubr.f32.gmra.mrb[0].mxu0 %v264
  %v335 = vpop.f32.mrb[0].mxu0
  %v336 = vadd.f32 0.0, %v335
  %v337 = vpop.f32.mrb[0].mxu0
  %338 = vmatprep.mubr.f32.mxu0 0.0
  %339 = vmatmul.mubr.f32.gmra.mrb[0].mxu0 %v267
  %v340 = vpop.f32.mrb[0].mxu0
  %v341 = vadd.f32 0.0, %v340
  %v342 = vpop.f32.mrb[0].mxu0
  %343 = vdwg.mxu0
  %344 = vadd.xlane.f32.xlu0 %v203
  %v345 = vpop.xlane.xlu0 %344
  %346 = vadd.xlane.f32.xlu0 %v208
  %v347 = vpop.xlane.xlu0 %346
  %348 = vadd.xlane.f32.xlu0 %v336
  %v349 = vpop.xlane.xlu0 %348
  %350 = vadd.xlane.f32.xlu0 %v341
  %v351 = vpop.xlane.xlu0 %350
  %v352 = vadd.f32 %v345, %v349
  %v353 = vadd.f32 %v347, %v351
  %v354 = vrcp.pop 256.0
  %v355 = vmul.f32 %v352, %v354
  %v356 = vmul.f32 %v353, %v354
  %v357 = vmul.f32 %v203, %v203
  %v358 = vmul.f32 %v208, %v208
  %359 = vadd.xlane.f32.xlu0 %v357
  %v360 = vpop.xlane.xlu0 %359
  %361 = vadd.xlane.f32.xlu0 %v358
  %v362 = vpop.xlane.xlu0 %361
  %v363 = vmul.f32 %v336, %v336
  %v364 = vmul.f32 %v341, %v341
  %365 = vadd.xlane.f32.xlu0 %v363
  %v366 = vpop.xlane.xlu0 %365
  %367 = vadd.xlane.f32.xlu0 %v364
  %v368 = vpop.xlane.xlu0 %367
  %v369 = vadd.f32 %v360, %v366
  %v370 = vadd.f32 %v362, %v368
  %v371 = vmul.f32 %v369, %v354
  %v372 = vmul.f32 %v370, %v354
  %v373 = vmul.f32 %v355, %v355
  %v374 = vmul.f32 %v356, %v356
  %v375 = vsub.f32 %v371, %v373
  %v376 = vsub.f32 %v372, %v374
  %v377 = vadd.f32 %v375, 1e-05
  %v378 = vadd.f32 %v376, 1e-05
  %v379 = vrsqrt.pop %v377
  %v380 = vrsqrt.pop %v378
  %v381 = vld [vmem:[%s3] sm:$0xff]
  %v382 = vld [vmem:[%s3 + $0x8] sm:$0xff]
  %v383 = vmul.f32 %v379, %v381
  %v384 = vmul.f32 %v380, %v382
  %v385 = vld [vmem:[%s4] sm:$0xff]
  %v386 = vld [vmem:[%s4 + $0x8] sm:$0xff]
  %v387 = vmul.f32 %v355, %v383
  %v388 = vmul.f32 %v356, %v384
  %v389 = vsub.f32 %v385, %v387
  %v390 = vsub.f32 %v386, %v388
  %392 = vset.pattern.permute.xlu0 0
  %393 = vperm.xlu0 %392, %v383
  %v394 = vpop.permute.xlu0 %393
  %397 = vset.pattern.permute.xlu0 0
  %398 = vperm.xlu0 %397, %v384
  %v399 = vpop.permute.xlu0 %398
  %v401 = vmul.f32 %v203, %v394
  %v402 = vmul.f32 %v208, %v399
  %404 = vset.pattern.permute.xlu0 0
  %405 = vperm.xlu0 %404, %v389
  %v406 = vpop.permute.xlu0 %405
  %409 = vset.pattern.permute.xlu0 0
  %410 = vperm.xlu0 %409, %v390
  %v411 = vpop.permute.xlu0 %410
  %v413 = vadd.f32 %v401, %v406
  %v414 = vadd.f32 %v402, %v411
  %vm415 = vcmp.ge.f32.partialorder %v413, 0.0
  %vm416 = vcmp.ge.f32.partialorder %v414, 0.0
  %v417 = vstv %s24
  %v418 = vmul.f32 %v417, %v413
  %v419 = vmul.f32 %v417, %v414
  %v420 = vsel %vm415, %v413, %v418
  %v421 = vsel %vm416, %v414, %v419
  %v422 = vmul.f32 %v336, %v394
  %v423 = vmul.f32 %v341, %v399
  %v424 = vadd.f32 %v422, %v406
  %v425 = vadd.f32 %v423, %v411
  %vm426 = vcmp.ge.f32.partialorder %v424, 0.0
  %vm427 = vcmp.ge.f32.partialorder %v425, 0.0
  %v428 = vmul.f32 %v417, %v424
  %v429 = vmul.f32 %v417, %v425
  %v430 = vsel %vm426, %v424, %v428
  %v431 = vsel %vm427, %v425, %v429
  %432 = vst.msk [vmem:[%s6] sm:$0xff] %vm121, %v420
  %433 = vst.msk [vmem:[%s6 + $0x8] sm:$0xff] %vm121, %v421
  %s434 = scalar_lea.vmem %s6, 32
  %435 = vst.msk [vmem:[%s434] sm:$0xff] %vm121, %v430
  %436 = vst.msk [vmem:[%s434 + $0x8] sm:$0xff] %vm121, %v431
  %439 = vrot.lane.b32.xlu0 %v420, 64
  %v440 = vpop.permute.xlu0 %439
  %441 = vrot.lane.b32.xlu0 %v421, 64
  %v442 = vpop.permute.xlu0 %441
  %s445 = scalar_lea.vmem %s6, 16
  %446 = vst.msk [vmem:[%s445] sm:$0xff] %vm121, %v440
  %447 = vst.msk [vmem:[%s445 + $0x8] sm:$0xff] %vm121, %v442
  %450 = vrot.lane.b32.xlu0 %v430, 64
  %v451 = vpop.permute.xlu0 %450
  %452 = vrot.lane.b32.xlu0 %v431, 64
  %v453 = vpop.permute.xlu0 %452
  %s456 = scalar_lea.vmem %s6, 48
  %457 = vst.msk [vmem:[%s456] sm:$0xff] %vm121, %v451
  %458 = vst.msk [vmem:[%s456 + $0x8] sm:$0xff] %vm121, %v453
  // Predicated region
  $region26: #{decode_stage_forward.2} parent=0 // pred_check
    _
  $region27: #{decode_stage_forward.2} parent=0 // pred_check_branch
    %460 = sbr.rel (0) target = $region29
  $region28: #{decode_stage_forward.2} parent=0 // pred_region
    _
  $region29: #{decode_stage_forward.2} parent=0 // pred_fallthru
    _
  // Predicated region
  $region30: #{decode_stage_forward.2} parent=0 // pred_check
    _
  $region31: #{decode_stage_forward.2} parent=0 // pred_check_branch
    %462 = sbr.rel (0) target = $region33
  $region32: #{decode_stage_forward.2} parent=0 // pred_region
    _
  $region33: #{decode_stage_forward.2} parent=0 // pred_fallthru
    _

// kernel: decode_stage_forward.3
$region0: #{decode_stage_forward.3}
  #allocation0 [shape = 'u32[]', space=smem, size = 0x4, offset = 0x4, fixed_abs, tag = 'smem constant byte address 0x4 - core index']
  #allocation1 [shape = 'u32[144,128]{1,0:T(1,128)}', space=vmem, size = 0x12000, scoped, tag = 'internal scratch']
  #allocation2 [shape = 'f32[2,24,135]{2,1,0:T(8,128)}', space=vmem, size = 0xc000, scoped, tag = 'scratch operand']
  #allocation3 [shape = 'f32[2,8,135]{2,1,0:T(8,128)}', space=vmem, size = 0x4000, scoped, tag = 'scratch operand']
  #allocation4 [shape = 'f32[1,1]{1,0:T(1,128)S(6)}', space=smem, size = 0x200, scoped, tag = 'scoped memory for decode_stage_forward.3']
  %s0 = inlined_call_operand.vmem [shape: f32[2,24,128], index: 0, kind: input, shape index: {}]
  %s1 = inlined_call_operand.vmem [shape: f32[8,192], index: 1, kind: input, shape index: {}]
  %s2 = inlined_call_operand.vmem [shape: f32[8,1], index: 2, kind: input, shape index: {}]
  %s3 = inlined_call_operand.vmem [shape: f32[8,1], index: 3, kind: input, shape index: {}]
  %s4 = inlined_call_operand.vmem [shape: f32[8,64], index: 4, kind: input, shape index: {}]
  %s5 = inlined_call_operand.vmem [shape: f32[8,1], index: 5, kind: input, shape index: {}]
  %s6 = inlined_call_operand.vmem [shape: f32[8,1], index: 6, kind: input, shape index: {}]
  %s7 = inlined_call_operand.<no memory space> [shape: f32[1,1], index: 7, kind: input, shape index: {}]
  %s8 = inlined_call_operand.hbm [shape: f32[2,8,128], index: 8, kind: output, shape index: {}]
  %s9 = sld [smem:[#allocation0]]
  $region42: #{decode_stage_forward.3} parent=0
    _
  %s11 = ssub.s32 1, %s9
  %s12 = scalar_select 0, %s11, %s9
  %13 = sst [smem:[#allocation4]] %s7
  $region1: #{decode_stage_forward.3} parent=0
    #allocation5 [shape = 'u8[8192]{0}', space=vmem, size = 0x2000, scoped, tag = 'output window, operand 0, single buffered']
    #allocation6 [shape = 's32[1]{0}', space=sflag, size = 0x4, scoped, tag = 'scoped memory for decode_stage_forward.3']
    %14 = vsyncpa [#allocation6], 0
    // Predicated region
    $region2: #{decode_stage_forward.3} parent=1 // pred_check
      _
    $region3: #{decode_stage_forward.3} parent=1 // pred_check_branch
      %16 = sbr.rel (0) target = $region5
    $region4: #{decode_stage_forward.3} parent=1 // pred_region
      _
    $region5: #{decode_stage_forward.3} parent=1 // pred_fallthru
      _
    // Predicated region
    $region6: #{decode_stage_forward.3} parent=1 // pred_check
      _
    $region7: #{decode_stage_forward.3} parent=1 // pred_check_branch
      %18 = sbr.rel (0) target = $region9
    $region8: #{decode_stage_forward.3} parent=1 // pred_region
      _
    $region9: #{decode_stage_forward.3} parent=1 // pred_fallthru
      _
    // Predicated region
    $region10: #{decode_stage_forward.3} parent=1 // pred_check
      _
    $region11: #{decode_stage_forward.3} parent=1 // pred_check_branch
      %20 = sbr.rel (0) target = $region13
    $region12: #{decode_stage_forward.3} parent=1 // pred_region
      _
    $region13: #{decode_stage_forward.3} parent=1 // pred_fallthru
      _
    // Predicated region
    $region14: #{decode_stage_forward.3} parent=1 // pred_check
      _
    $region15: #{decode_stage_forward.3} parent=1 // pred_check_branch
      %22 = sbr.rel (0) target = $region17
    $region16: #{decode_stage_forward.3} parent=1 // pred_region
      _
    $region17: #{decode_stage_forward.3} parent=1 // pred_fallthru
      _
    // Predicated region
    $region18: #{decode_stage_forward.3} parent=1 // pred_check
      _
    $region19: #{decode_stage_forward.3} parent=1 // pred_check_branch
      %24 = sbr.rel (0) target = $region21
    $region20: #{decode_stage_forward.3} parent=1 // pred_region
      _
    $region21: #{decode_stage_forward.3} parent=1 // pred_fallthru
      _
    // Predicated region
    $region22: #{decode_stage_forward.3} parent=1 // pred_check
      _
    $region23: #{decode_stage_forward.3} parent=1 // pred_check_branch
      %26 = sbr.rel (0) target = $region25
    $region24: #{decode_stage_forward.3} parent=1 // pred_region
      _
    $region25: #{decode_stage_forward.3} parent=1 // pred_fallthru
      _
    // Predicated region
    $region26: #{decode_stage_forward.3} parent=1 // pred_check
      _
    $region27: #{decode_stage_forward.3} parent=1 // pred_check_branch
      %28 = sbr.rel (0) target = $region29
    $region28: #{decode_stage_forward.3} parent=1 // pred_region
      _
    $region29: #{decode_stage_forward.3} parent=1 // pred_fallthru
      _
    // Predicated region
    $region30: #{decode_stage_forward.3} parent=1 // pred_check
      _
    $region31: #{decode_stage_forward.3} parent=1 // pred_check_branch
      %30 = sbr.rel (0) target = $region33
    $region32: #{decode_stage_forward.3} parent=1 // pred_region
      _
    $region33: #{decode_stage_forward.3} parent=1 // pred_fallthru
      _
    %s31 = sld [smem:[#allocation4]]
    %32 = vst [vmem:[#allocation2] sm:$0xff] 0.0
    %vm33 = vcmask 56320
    %34 = vst.msk [vmem:[#allocation2 + $0x8] sm:$0xff] %vm33, 0.0
    %35 = vst [vmem:[#allocation2 + $0x10] sm:$0xff] 0.0
    %36 = vst.msk [vmem:[#allocation2 + $0x18] sm:$0xff] %vm33, 0.0
    %37 = vst [vmem:[#allocation2 + $0x20] sm:$0xff] 0.0
    %38 = vst.msk [vmem:[#allocation2 + $0x28] sm:$0xff] %vm33, 0.0
    %39 = vst [vmem:[#allocation2 + $0x30] sm:$0xff] 0.0
    %40 = vst.msk [vmem:[#allocation2 + $0x38] sm:$0xff] %vm33, 0.0
    %41 = vst [vmem:[#allocation2 + $0x40] sm:$0xff] 0.0
    %42 = vst.msk [vmem:[#allocation2 + $0x48] sm:$0xff] %vm33, 0.0
    %43 = vst [vmem:[#allocation2 + $0x50] sm:$0xff] 0.0
    %44 = vst.msk [vmem:[#allocation2 + $0x58] sm:$0xff] %vm33, 0.0
    %v45 = vld [vmem:[%s0] sm:$0xff]
    %v46 = vld [vmem:[%s0 + $0x8] sm:$0xff]
    %v47 = vld [vmem:[%s0 + $0x10] sm:$0xff]
    %51 = vrot.lane.b32.xlu0 %v45, 4
    %v52 = vpop.permute.xlu0 %51
    %53 = vrot.lane.b32.xlu0 %v46, 4
    %v54 = vpop.permute.xlu0 %53
    %55 = vrot.lane.b32.xlu0 %v47, 4
    %v56 = vpop.permute.xlu0 %55
    %vm60 = vcmask 1047584
    %61 = vst.msk [vmem:[#allocation2] sm:$0xff] %vm60, %v52
    %vm62 = vcmask 31744
    %63 = vst.msk [vmem:[#allocation2 + $0x8] sm:$0xff] %vm62, %v52
    %64 = vst.msk [vmem:[#allocation2 + $0x10] sm:$0xff] %vm60, %v54
    %65 = vst.msk [vmem:[#allocation2 + $0x18] sm:$0xff] %vm62, %v54
    %66 = vst.msk [vmem:[#allocation2 + $0x20] sm:$0xff] %vm60, %v56
    %67 = vst.msk [vmem:[#allocation2 + $0x28] sm:$0xff] %vm62, %v56
    %s68 = scalar_lea.vmem %s0, 24
    %v69 = vld [vmem:[%s68] sm:$0xff]
    %v70 = vld [vmem:[%s68 + $0x8] sm:$0xff]
    %v71 = vld [vmem:[%s68 + $0x10] sm:$0xff]
    %75 = vrot.lane.b32.xlu0 %v69, 4
    %v76 = vpop.permute.xlu0 %75
    %77 = vrot.lane.b32.xlu0 %v70, 4
    %v78 = vpop.permute.xlu0 %77
    %79 = vrot.lane.b32.xlu0 %v71, 4
    %v80 = vpop.permute.xlu0 %79
    %s84 = scalar_lea.vmem [#allocation2], 48
    %85 = vst.msk [vmem:[%s84] sm:$0xff] %vm60, %v76
    %86 = vst.msk [vmem:[%s84 + $0x8] sm:$0xff] %vm62, %v76
    %87 = vst.msk [vmem:[%s84 + $0x10] sm:$0xff] %vm60, %v78
    %88 = vst.msk [vmem:[%s84 + $0x18] sm:$0xff] %vm62, %v78
    %89 = vst.msk [vmem:[%s84 + $0x20] sm:$0xff] %vm60, %v80
    %90 = vst.msk [vmem:[%s84 + $0x28] sm:$0xff] %vm62, %v80
    %v91 = vld [vmem:[#allocation2] sm:$0xff]
    %v92 = vld [vmem:[#allocation2 + $0x8] sm:$0xff]
    %v93 = vld [vmem:[#allocation2 + $0x10] sm:$0xff]
    %v94 = vld [vmem:[#allocation2 + $0x18] sm:$0xff]
    %v95 = vld [vmem:[#allocation2 + $0x20] sm:$0xff]
    %v96 = vld [vmem:[#allocation2 + $0x28] sm:$0xff]
    %103 = vrot.lane.b32.xlu0 %v91, 127
    %v104 = vpop.permute.xlu0 %103
    %105 = vrot.lane.b32.xlu0 %v92, 127
    %v106 = vpop.permute.xlu0 %105
    %107 = vrot.lane.b32.xlu0 %v93, 127
    %v108 = vpop.permute.xlu0 %107
    %109 = vrot.lane.b32.xlu0 %v94, 127
    %v110 = vpop.permute.xlu0 %109
    %111 = vrot.lane.b32.xlu0 %v95, 127
    %v112 = vpop.permute.xlu0 %111
    %113 = vrot.lane.b32.xlu0 %v96, 127
    %v114 = vpop.permute.xlu0 %113
    %vm115 = vcmask 1039360
    %v116 = vsel %vm115, %v104, %v106
    %v117 = vsel %vm115, %v108, %v110
    %v118 = vsel %vm115, %v112, %v114
    %122 = vrot.lane.b32.xlu0 %v91, 126
    %v123 = vpop.permute.xlu0 %122
    %124 = vrot.lane.b32.xlu0 %v92, 126
    %v125 = vpop.permute.xlu0 %124
    %126 = vrot.lane.b32.xlu0 %v93, 126
    %v127 = vpop.permute.xlu0 %126
    %128 = vrot.lane.b32.xlu0 %v94, 126
    %v129 = vpop.permute.xlu0 %128
    %130 = vrot.lane.b32.xlu0 %v95, 126
    %v131 = vpop.permute.xlu0 %130
    %132 = vrot.lane.b32.xlu0 %v96, 126
    %v133 = vpop.permute.xlu0 %132
    %vm134 = vcmask 1031168
    %v135 = vsel %vm134, %v123, %v125
    %v136 = vsel %vm134, %v127, %v129
    %v137 = vsel %vm134, %v131, %v133
    %141 = vrot.lane.b32.xlu0 %v91, 125
    %v142 = vpop.permute.xlu0 %141
    %143 = vrot.lane.b32.xlu0 %v92, 125
    %v144 = vpop.permute.xlu0 %143
    %145 = vrot.lane.b32.xlu0 %v93, 125
    %v146 = vpop.permute.xlu0 %145
    %147 = vrot.lane.b32.xlu0 %v94, 125
    %v148 = vpop.permute.xlu0 %147
    %149 = vrot.lane.b32.xlu0 %v95, 125
    %v150 = vpop.permute.xlu0 %149
    %151 = vrot.lane.b32.xlu0 %v96, 125
    %v152 = vpop.permute.xlu0 %151
    %vm153 = vcmask 1022976
    %v154 = vsel %vm153, %v142, %v144
    %v155 = vsel %vm153, %v146, %v148
    %v156 = vsel %vm153, %v150, %v152
    %160 = vrot.lane.b32.xlu0 %v91, 124
    %v161 = vpop.permute.xlu0 %160
    %162 = vrot.lane.b32.xlu0 %v92, 124
    %v163 = vpop.permute.xlu0 %162
    %164 = vrot.lane.b32.xlu0 %v93, 124
    %v165 = vpop.permute.xlu0 %164
    %166 = vrot.lane.b32.xlu0 %v94, 124
    %v167 = vpop.permute.xlu0 %166
    %168 = vrot.lane.b32.xlu0 %v95, 124
    %v169 = vpop.permute.xlu0 %168
    %170 = vrot.lane.b32.xlu0 %v96, 124
    %v171 = vpop.permute.xlu0 %170
    %vm172 = vcmask 1014784
    %v173 = vsel %vm172, %v161, %v163
    %v174 = vsel %vm172, %v165, %v167
    %v175 = vsel %vm172, %v169, %v171
    %179 = vrot.lane.b32.xlu0 %v91, 123
    %v180 = vpop.permute.xlu0 %179
    %181 = vrot.lane.b32.xlu0 %v92, 123
    %v182 = vpop.permute.xlu0 %181
    %183 = vrot.lane.b32.xlu0 %v93, 123
    %v184 = vpop.permute.xlu0 %183
    %185 = vrot.lane.b32.xlu0 %v94, 123
    %v186 = vpop.permute.xlu0 %185
    %187 = vrot.lane.b32.xlu0 %v95, 123
    %v188 = vpop.permute.xlu0 %187
    %189 = vrot.lane.b32.xlu0 %v96, 123
    %v190 = vpop.permute.xlu0 %189
    %vm191 = vcmask 1006592
    %v192 = vsel %vm191, %v180, %v182
    %v193 = vsel %vm191, %v184, %v186
    %v194 = vsel %vm191, %v188, %v190
    %198 = vrot.lane.b32.xlu0 %v91, 122
    %v199 = vpop.permute.xlu0 %198
    %200 = vrot.lane.b32.xlu0 %v92, 122
    %v201 = vpop.permute.xlu0 %200
    %202 = vrot.lane.b32.xlu0 %v93, 122
    %v203 = vpop.permute.xlu0 %202
    %204 = vrot.lane.b32.xlu0 %v94, 122
    %v205 = vpop.permute.xlu0 %204
    %206 = vrot.lane.b32.xlu0 %v95, 122
    %v207 = vpop.permute.xlu0 %206
    %208 = vrot.lane.b32.xlu0 %v96, 122
    %v209 = vpop.permute.xlu0 %208
    %vm210 = vcmask 998400
    %v211 = vsel %vm210, %v199, %v201
    %v212 = vsel %vm210, %v203, %v205
    %v213 = vsel %vm210, %v207, %v209
    %217 = vrot.lane.b32.xlu0 %v91, 121
    %v218 = vpop.permute.xlu0 %217
    %219 = vrot.lane.b32.xlu0 %v92, 121
    %v220 = vpop.permute.xlu0 %219
    %221 = vrot.lane.b32.xlu0 %v93, 121
    %v222 = vpop.permute.xlu0 %221
    %223 = vrot.lane.b32.xlu0 %v94, 121
    %v224 = vpop.permute.xlu0 %223
    %225 = vrot.lane.b32.xlu0 %v95, 121
    %v226 = vpop.permute.xlu0 %225
    %227 = vrot.lane.b32.xlu0 %v96, 121
    %v228 = vpop.permute.xlu0 %227
    %vm229 = vcmask 990208
    %v230 = vsel %vm229, %v218, %v220
    %v231 = vsel %vm229, %v222, %v224
    %v232 = vsel %vm229, %v226, %v228
    %v236 = vld [vmem:[%s84] sm:$0xff]
    %v237 = vld [vmem:[%s84 + $0x8] sm:$0xff]
    %v238 = vld [vmem:[%s84 + $0x10] sm:$0xff]
    %v239 = vld [vmem:[%s84 + $0x18] sm:$0xff]
    %v240 = vld [vmem:[%s84 + $0x20] sm:$0xff]
    %v241 = vld [vmem:[%s84 + $0x28] sm:$0xff]
    %248 = vrot.lane.b32.xlu0 %v236, 127
    %v249 = vpop.permute.xlu0 %248
    %250 = vrot.lane.b32.xlu0 %v237, 127
    %v251 = vpop.permute.xlu0 %250
    %252 = vrot.lane.b32.xlu0 %v238, 127
    %v253 = vpop.permute.xlu0 %252
    %254 = vrot.lane.b32.xlu0 %v239, 127
    %v255 = vpop.permute.xlu0 %254
    %256 = vrot.lane.b32.xlu0 %v240, 127
    %v257 = vpop.permute.xlu0 %256
    %258 = vrot.lane.b32.xlu0 %v241, 127
    %v259 = vpop.permute.xlu0 %258
    %v260 = vsel %vm115, %v249, %v251
    %v261 = vsel %vm115, %v253, %v255
    %v262 = vsel %vm115, %v257, %v259
    %266 = vrot.lane.b32.xlu0 %v236, 126
    %v267 = vpop.permute.xlu0 %266
    %268 = vrot.lane.b32.xlu0 %v237, 126
    %v269 = vpop.permute.xlu0 %268
    %270 = vrot.lane.b32.xlu0 %v238, 126
    %v271 = vpop.permute.xlu0 %270
    %272 = vrot.lane.b32.xlu0 %v239, 126
    %v273 = vpop.permute.xlu0 %272
    %274 = vrot.lane.b32.xlu0 %v240, 126
    %v275 = vpop.permute.xlu0 %274
    %276 = vrot.lane.b32.xlu0 %v241, 126
    %v277 = vpop.permute.xlu0 %276
    %v278 = vsel %vm134, %v267, %v269
    %v279 = vsel %vm134, %v271, %v273
    %v280 = vsel %vm134, %v275, %v277
    %284 = vrot.lane.b32.xlu0 %v236, 125
    %v285 = vpop.permute.xlu0 %284
    %286 = vrot.lane.b32.xlu0 %v237, 125
    %v287 = vpop.permute.xlu0 %286
    %288 = vrot.lane.b32.xlu0 %v238, 125
    %v289 = vpop.permute.xlu0 %288
    %290 = vrot.lane.b32.xlu0 %v239, 125
    %v291 = vpop.permute.xlu0 %290
    %292 = vrot.lane.b32.xlu0 %v240, 125
    %v293 = vpop.permute.xlu0 %292
    %294 = vrot.lane.b32.xlu0 %v241, 125
    %v295 = vpop.permute.xlu0 %294
    %v296 = vsel %vm153, %v285, %v287
    %v297 = vsel %vm153, %v289, %v291
    %v298 = vsel %vm153, %v293, %v295
    %302 = vrot.lane.b32.xlu0 %v236, 124
    %v303 = vpop.permute.xlu0 %302
    %304 = vrot.lane.b32.xlu0 %v237, 124
    %v305 = vpop.permute.xlu0 %304
    %306 = vrot.lane.b32.xlu0 %v238, 124
    %v307 = vpop.permute.xlu0 %306
    %308 = vrot.lane.b32.xlu0 %v239, 124
    %v309 = vpop.permute.xlu0 %308
    %310 = vrot.lane.b32.xlu0 %v240, 124
    %v311 = vpop.permute.xlu0 %310
    %312 = vrot.lane.b32.xlu0 %v241, 124
    %v313 = vpop.permute.xlu0 %312
    %v314 = vsel %vm172, %v303, %v305
    %v315 = vsel %vm172, %v307, %v309
    %v316 = vsel %vm172, %v311, %v313
    %320 = vrot.lane.b32.xlu0 %v236, 123
    %v321 = vpop.permute.xlu0 %320
    %322 = vrot.lane.b32.xlu0 %v237, 123
    %v323 = vpop.permute.xlu0 %322
    %324 = vrot.lane.b32.xlu0 %v238, 123
    %v325 = vpop.permute.xlu0 %324
    %326 = vrot.lane.b32.xlu0 %v239, 123
    %v327 = vpop.permute.xlu0 %326
    %328 = vrot.lane.b32.xlu0 %v240, 123
    %v329 = vpop.permute.xlu0 %328
    %330 = vrot.lane.b32.xlu0 %v241, 123
    %v331 = vpop.permute.xlu0 %330
    %v332 = vsel %vm191, %v321, %v323
    %v333 = vsel %vm191, %v325, %v327
    %v334 = vsel %vm191, %v329, %v331
    %338 = vrot.lane.b32.xlu0 %v236, 122
    %v339 = vpop.permute.xlu0 %338
    %340 = vrot.lane.b32.xlu0 %v237, 122
    %v341 = vpop.permute.xlu0 %340
    %342 = vrot.lane.b32.xlu0 %v238, 122
    %v343 = vpop.permute.xlu0 %342
    %344 = vrot.lane.b32.xlu0 %v239, 122
    %v345 = vpop.permute.xlu0 %344
    %346 = vrot.lane.b32.xlu0 %v240, 122
    %v347 = vpop.permute.xlu0 %346
    %348 = vrot.lane.b32.xlu0 %v241, 122
    %v349 = vpop.permute.xlu0 %348
    %v350 = vsel %vm210, %v339, %v341
    %v351 = vsel %vm210, %v343, %v345
    %v352 = vsel %vm210, %v347, %v349
    %356 = vrot.lane.b32.xlu0 %v236, 121
    %v357 = vpop.permute.xlu0 %356
    %358 = vrot.lane.b32.xlu0 %v237, 121
    %v359 = vpop.permute.xlu0 %358
    %360 = vrot.lane.b32.xlu0 %v238, 121
    %v361 = vpop.permute.xlu0 %360
    %362 = vrot.lane.b32.xlu0 %v239, 121
    %v363 = vpop.permute.xlu0 %362
    %364 = vrot.lane.b32.xlu0 %v240, 121
    %v365 = vpop.permute.xlu0 %364
    %366 = vrot.lane.b32.xlu0 %v241, 121
    %v367 = vpop.permute.xlu0 %366
    %v368 = vsel %vm229, %v357, %v359
    %v369 = vsel %vm229, %v361, %v363
    %v370 = vsel %vm229, %v365, %v367
    %v374 = vld [vmem:[%s1] sm:$0xff]
    %v375 = vld [vmem:[%s1 + $0x8] sm:$0xff]
    %vm376 = vcmask 523264
    %v378 = vsel %vm376, %v375, 0
    %380 = vmatprep.subr.mxu0 %v236
    %381 = vmatpush1.msra.mxu0 %v91
    %382 = vmatprep.subr.mxu0 %v238
    %383 = vmatpush1.msra.mxu0 %v93
    %384 = vmatprep.subr.mxu0 %v240
    %385 = vmatpush1.msra.mxu0 %v95
    %386 = vmatprep.subr.mxu0 %v260
    %387 = vmatpush1.msra.mxu0 %v116
    %388 = vmatprep.subr.mxu0 %v261
    %389 = vmatpush1.msra.mxu0 %v117
    %390 = vmatprep.subr.mxu0 %v262
    %391 = vmatpush1.msra.mxu0 %v118
    %392 = vmatprep.subr.mxu0 %v278
    %393 = vmatpush1.msra.mxu0 %v135
    %394 = vmatprep.subr.mxu0 %v279
    %395 = vmatpush1.msra.mxu0 %v136
    %396 = vmatprep.subr.mxu0 %v280
    %397 = vmatpush1.msra.mxu0 %v137
    %398 = vmatprep.subr.mxu0 %v296
    %399 = vmatpush1.msra.mxu0 %v154
    %400 = vmatprep.subr.mxu0 %v297
    %401 = vmatpush1.msra.mxu0 %v155
    %402 = vmatprep.subr.mxu0 %v298
    %403 = vmatpush1.msra.mxu0 %v156
    %404 = vmatprep.subr.mxu0 %v314
    %405 = vmatpush1.msra.mxu0 %v173
    %406 = vmatprep.subr.mxu0 %v315
    %407 = vmatpush1.msra.mxu0 %v174
    %408 = vmatprep.subr.mxu0 %v316
    %409 = vmatpush1.msra.mxu0 %v175
    %410 = vmatprep.subr.mxu0 %v332
    %411 = vmatpush1.msra.mxu0 %v192
    %412 = vmatprep.subr.mxu0 %v333
    %413 = vmatpush1.msra.mxu0 %v193
    %414 = vmatprep.subr.mxu0 %v334
    %415 = vmatpush1.msra.mxu0 %v194
    %416 = vmatprep.subr.mxu0 %v350
    %417 = vmatpush1.msra.mxu0 %v211
    %418 = vmatprep.subr.mxu0 %v351
    %419 = vmatpush1.msra.mxu0 %v212
    %420 = vmatprep.subr.mxu0 %v352
    %421 = vmatpush1.msra.mxu0 %v213
    %422 = vmatprep.subr.mxu0 %v368
    %423 = vmatpush1.msra.mxu0 %v230
    %424 = vmatprep.subr.mxu0 %v369
    %425 = vmatpush1.msra.mxu0 %v231
    %426 = vmatprep.subr.mxu0 %v370
    %427 = vmatpush1.msra.mxu0 %v232
    %428 = vmatprep.subr.mxu0 0.0
    %429 = vmatpush1.msra.mxu0 0.0
    %430 = vmatprep.subr.mxu0 0.0
    %431 = vmatpush1.msra.mxu0 0.0
    %432 = vmatprep.subr.mxu0 0.0
    %433 = vmatpush1.msra.mxu0 0.0
    %434 = vmatprep.subr.mxu0 0.0
    %435 = vmatpush1.msra.mxu0 0.0
    %436 = vmatprep.subr.mxu0 0.0
    %437 = vmatpush1.msra.mxu0 0.0
    %438 = vmatprep.subr.mxu0 0.0
    %439 = vmatpush1.msra.mxu0 0.0
    %440 = vmatprep.subr.mxu0 0.0
    %441 = vmatpush1.msra.mxu0 0.0
    %442 = vmatprep.subr.mxu0 0.0
    %443 = vmatpush1.msra.mxu0 0.0
    %444 = vmatprep.mubr.f32.mxu0 %v378
    %445 = vmatmul.mubr.f32.gmra.mrb[0].mxu0 %v374
    %v446 = vpop.f32.mrb[0].mxu0
    %v447 = vadd.f32 0.0, %v446
    %v448 = vpop.f32.mrb[0].mxu0
    %v449 = vadd.f32 0.0, %v448
    %450 = vdwg.mxu0
    %v451 = vadd.f32 %v447, %v449
    %452 = vadd.xlane.f32.xlu0 %v451
    %v453 = vpop.xlane.xlu0 %452
    %v454 = vrcp.pop 256.0
    %v455 = vmul.f32 %v453, %v454
    %v456 = vmul.f32 %v447, %v447
    %v457 = vmul.f32 %v449, %v449
    %v458 = vadd.f32 %v456, %v457
    %459 = vadd.xlane.f32.xlu0 %v458
    %v460 = vpop.xlane.xlu0 %459
    %v461 = vmul.f32 %v460, %v454
    %v462 = vmul.f32 %v455, %v455
    %v463 = vsub.f32 %v461, %v462
    %v464 = vadd.f32 %v463, 1e-05
    %v465 = vrsqrt.pop %v464
    %v466 = vld [vmem:[%s2] sm:$0xff]
    %v467 = vmul.f32 %v465, %v466
    %v468 = vld [vmem:[%s3] sm:$0xff]
    %v469 = vmul.f32 %v455, %v467
    %v470 = vsub.f32 %v468, %v469
    %472 = vset.pattern.permute.xlu0 0
    %473 = vperm.xlu0 %472, %v467
    %v474 = vpop.permute.xlu0 %473
    %v476 = vmul.f32 %v447, %v474
    %v477 = vmul.f32 %v449, %v474
    %479 = vset.pattern.permute.xlu0 0
    %480 = vperm.xlu0 %479, %v470
    %v481 = vpop.permute.xlu0 %480
    %v483 = vadd.f32 %v476, %v481
    %v484 = vadd.f32 %v477, %v481
    %vm485 = vcmp.ge.f32.partialorder %v483, 0.0
    %vm486 = vcmp.ge.f32.partialorder %v484, 0.0
    %v487 = vstv %s31
    %v488 = vmul.f32 %v487, %v483
    %v489 = vmul.f32 %v487, %v484
    %v490 = vsel %vm485, %v483, %v488
    %v491 = vsel %vm486, %v484, %v489
    %492 = vst [vmem:[#allocation3] sm:$0xff] 0.0
    %493 = vst.msk [vmem:[#allocation3 + $0x8] sm:$0xff] %vm33, 0.0
    %494 = vst [vmem:[#allocation3 + $0x10] sm:$0xff] 0.0
    %495 = vst.msk [vmem:[#allocation3 + $0x18] sm:$0xff] %vm33, 0.0
    %497 = vrot.lane.b32.xlu0 %v490, 4
    %v498 = vpop.permute.xlu0 %497
    %500 = vst.msk [vmem:[#allocation3] sm:$0xff] %vm60, %v498
    %501 = vst.msk [vmem:[#allocation3 + $0x8] sm:$0xff] %vm62, %v498
    %503 = vrot.lane.b32.xlu0 %v491, 4
    %v504 = vpop.permute.xlu0 %503
    %s506 = scalar_lea.vmem [#allocation3], 16
    %507 = vst.msk [vmem:[%s506] sm:$0xff] %vm60, %v504
    %508 = vst.msk [vmem:[%s506 + $0x8] sm:$0xff] %vm62, %v504
    %v509 = vld [vmem:[#allocation3] sm:$0xff]
    %v510 = vld [vmem:[#allocation3 + $0x8] sm:$0xff]
    %513 = vrot.lane.b32.xlu0 %v509, 127
    %v514 = vpop.permute.xlu0 %513
    %515 = vrot.lane.b32.xlu0 %v510, 127
    %v516 = vpop.permute.xlu0 %515
    %v517 = vsel %vm115, %v514, %v516
    %519 = vrot.lane.b32.xlu0 %v509, 126
    %v520 = vpop.permute.xlu0 %519
    %521 = vrot.lane.b32.xlu0 %v510, 126
    %v522 = vpop.permute.xlu0 %521
    %v523 = vsel %vm134, %v520, %v522
    %525 = vrot.lane.b32.xlu0 %v509, 125
    %v526 = vpop.permute.xlu0 %525
    %527 = vrot.lane.b32.xlu0 %v510, 125
    %v528 = vpop.permute.xlu0 %527
    %v529 = vsel %vm153, %v526, %v528
    %531 = vrot.lane.b32.xlu0 %v509, 124
    %v532 = vpop.permute.xlu0 %531
    %533 = vrot.lane.b32.xlu0 %v510, 124
    %v534 = vpop.permute.xlu0 %533
    %v535 = vsel %vm172, %v532, %v534
    %537 = vrot.lane.b32.xlu0 %v509, 123
    %v538 = vpop.permute.xlu0 %537
    %539 = vrot.lane.b32.xlu0 %v510, 123
    %v540 = vpop.permute.xlu0 %539
    %v541 = vsel %vm191, %v538, %v540
    %543 = vrot.lane.b32.xlu0 %v509, 122
    %v544 = vpop.permute.xlu0 %543
    %545 = vrot.lane.b32.xlu0 %v510, 122
    %v546 = vpop.permute.xlu0 %545
    %v547 = vsel %vm210, %v544, %v546
    %549 = vrot.lane.b32.xlu0 %v509, 121
    %v550 = vpop.permute.xlu0 %549
    %551 = vrot.lane.b32.xlu0 %v510, 121
    %v552 = vpop.permute.xlu0 %551
    %v553 = vsel %vm229, %v550, %v552
    %v555 = vld [vmem:[%s506] sm:$0xff]
    %v556 = vld [vmem:[%s506 + $0x8] sm:$0xff]
    %559 = vrot.lane.b32.xlu0 %v555, 127
    %v560 = vpop.permute.xlu0 %559
    %561 = vrot.lane.b32.xlu0 %v556, 127
    %v562 = vpop.permute.xlu0 %561
    %v563 = vsel %vm115, %v560, %v562
    %565 = vrot.lane.b32.xlu0 %v555, 126
    %v566 = vpop.permute.xlu0 %565
    %567 = vrot.lane.b32.xlu0 %v556, 126
    %v568 = vpop.permute.xlu0 %567
    %v569 = vsel %vm134, %v566, %v568
    %571 = vrot.lane.b32.xlu0 %v555, 125
    %v572 = vpop.permute.xlu0 %571
    %573 = vrot.lane.b32.xlu0 %v556, 125
    %v574 = vpop.permute.xlu0 %573
    %v575 = vsel %vm153, %v572, %v574
    %577 = vrot.lane.b32.xlu0 %v555, 124
    %v578 = vpop.permute.xlu0 %577
    %579 = vrot.lane.b32.xlu0 %v556, 124
    %v580 = vpop.permute.xlu0 %579
    %v581 = vsel %vm172, %v578, %v580
    %583 = vrot.lane.b32.xlu0 %v555, 123
    %v584 = vpop.permute.xlu0 %583
    %585 = vrot.lane.b32.xlu0 %v556, 123
    %v586 = vpop.permute.xlu0 %585
    %v587 = vsel %vm191, %v584, %v586
    %589 = vrot.lane.b32.xlu0 %v555, 122
    %v590 = vpop.permute.xlu0 %589
    %591 = vrot.lane.b32.xlu0 %v556, 122
    %v592 = vpop.permute.xlu0 %591
    %v593 = vsel %vm210, %v590, %v592
    %595 = vrot.lane.b32.xlu0 %v555, 121
    %v596 = vpop.permute.xlu0 %595
    %597 = vrot.lane.b32.xlu0 %v556, 121
    %v598 = vpop.permute.xlu0 %597
    %v599 = vsel %vm229, %v596, %v598
    %v601 = vld [vmem:[%s4] sm:$0xff]
    %v603 = vsel %vm376, %v601, 0
    %605 = vmatprep.subr.mxu0 %v555
    %606 = vmatpush1.msra.mxu0 %v509
    %607 = vmatprep.subr.mxu0 %v563
    %608 = vmatpush1.msra.mxu0 %v517
    %609 = vmatprep.subr.mxu0 %v569
    %610 = vmatpush1.msra.mxu0 %v523
    %611 = vmatprep.subr.mxu0 %v575
    %612 = vmatpush1.msra.mxu0 %v529
    %613 = vmatprep.subr.mxu0 %v581
    %614 = vmatpush1.msra.mxu0 %v535
    %615 = vmatprep.subr.mxu0 %v587
    %616 = vmatpush1.msra.mxu0 %v541
    %617 = vmatprep.subr.mxu0 %v593
    %618 = vmatpush1.msra.mxu0 %v547
    %619 = vmatprep.subr.mxu0 %v599
    %620 = vmatpush1.msra.mxu0 %v553
    %621 = vmatprep.subr.mxu0 0.0
    %622 = vmatpush1.msra.mxu0 0.0
    %623 = vmatprep.subr.mxu0 0.0
    %624 = vmatpush1.msra.mxu0 0.0
    %625 = vmatprep.subr.mxu0 0.0
    %626 = vmatpush1.msra.mxu0 0.0
    %627 = vmatprep.subr.mxu0 0.0
    %628 = vmatpush1.msra.mxu0 0.0
    %629 = vmatprep.subr.mxu0 0.0
    %630 = vmatpush1.msra.mxu0 0.0
    %631 = vmatprep.subr.mxu0 0.0
    %632 = vmatpush1.msra.mxu0 0.0
    %633 = vmatprep.subr.mxu0 0.0
    %634 = vmatpush1.msra.mxu0 0.0
    %635 = vmatprep.subr.mxu0 0.0
    %636 = vmatpush1.msra.mxu0 0.0
    %637 = vmatprep.subr.mxu0 0.0
    %638 = vmatpush1.msra.mxu0 0.0
    %639 = vmatprep.subr.mxu0 0.0
    %640 = vmatpush1.msra.mxu0 0.0
    %641 = vmatprep.subr.mxu0 0.0
    %642 = vmatpush1.msra.mxu0 0.0
    %643 = vmatprep.subr.mxu0 0.0
    %644 = vmatpush1.msra.mxu0 0.0
    %645 = vmatprep.subr.mxu0 0.0
    %646 = vmatpush1.msra.mxu0 0.0
    %647 = vmatprep.subr.mxu0 0.0
    %648 = vmatpush1.msra.mxu0 0.0
    %649 = vmatprep.subr.mxu0 0.0
    %650 = vmatpush1.msra.mxu0 0.0
    %651 = vmatprep.subr.mxu0 0.0
    %652 = vmatpush1.msra.mxu0 0.0
    %653 = vmatprep.subr.mxu0 0.0
    %654 = vmatpush1.msra.mxu0 0.0
    %655 = vmatprep.subr.mxu0 0.0
    %656 = vmatpush1.msra.mxu0 0.0
    %657 = vmatprep.subr.mxu0 0.0
    %658 = vmatpush1.msra.mxu0 0.0
    %659 = vmatprep.subr.mxu0 0.0
    %660 = vmatpush1.msra.mxu0 0.0
    %661 = vmatprep.subr.mxu0 0.0
    %662 = vmatpush1.msra.mxu0 0.0
    %663 = vmatprep.subr.mxu0 0.0
    %664 = vmatpush1.msra.mxu0 0.0
    %665 = vmatprep.subr.mxu0 0.0
    %666 = vmatpush1.msra.mxu0 0.0
    %667 = vmatprep.subr.mxu0 0.0
    %668 = vmatpush1.msra.mxu0 0.0
    %669 = vmatprep.mubr.f32.mxu0 0.0
    %670 = vmatmul.mubr.f32.gmra.mrb[0].mxu0 %v603
    %v671 = vpop.f32.mrb[0].mxu0
    %v672 = vadd.f32 0.0, %v671
    %v673 = vpop.f32.mrb[0].mxu0
    %v674 = vadd.f32 0.0, %v673
    %675 = vdwg.mxu0
    %v676 = vadd.f32 %v672, %v674
    %677 = vadd.xlane.f32.xlu0 %v676
    %v678 = vpop.xlane.xlu0 %677
    %v679 = vmul.f32 %v678, %v454
    %v680 = vmul.f32 %v672, %v672
    %v681 = vmul.f32 %v674, %v674
    %v682 = vadd.f32 %v680, %v681
    %683 = vadd.xlane.f32.xlu0 %v682
    %v684 = vpop.xlane.xlu0 %683
    %v685 = vmul.f32 %v684, %v454
    %v686 = vmul.f32 %v679, %v679
    %v687 = vsub.f32 %v685, %v686
    %v688 = vadd.f32 %v687, 1e-05
    %v689 = vrsqrt.pop %v688
    %v690 = vld [vmem:[%s5] sm:$0xff]
    %v691 = vmul.f32 %v689, %v690
    %v692 = vld [vmem:[%s6] sm:$0xff]
    %v693 = vmul.f32 %v679, %v691
    %v694 = vsub.f32 %v692, %v693
    %696 = vset.pattern.permute.xlu0 0
    %697 = vperm.xlu0 %696, %v691
    %v698 = vpop.permute.xlu0 %697
    %v700 = vmul.f32 %v672, %v698
    %v701 = vmul.f32 %v674, %v698
    %703 = vset.pattern.permute.xlu0 0
    %704 = vperm.xlu0 %703, %v694
    %v705 = vpop.permute.xlu0 %704
    %v707 = vadd.f32 %v700, %v705
    %v708 = vadd.f32 %v701, %v705
    %vm709 = vcmp.ge.f32.partialorder %v707, 0.0
    %vm710 = vcmp.ge.f32.partialorder %v708, 0.0
    %v711 = vmul.f32 %v487, %v707
    %v712 = vmul.f32 %v487, %v708
    %v713 = vsel %vm709, %v707, %v711
    %v714 = vsel %vm710, %v708, %v712
    %715 = vst [vmem:[#allocation5] sm:$0xff] %v713
    %s716 = scalar_lea.vmem [#allocation5], 8
    %717 = vst [vmem:[%s716] sm:$0xff] %v714
    // Predicated region
    $region34: #{decode_stage_forward.3} parent=1 // pred_check
      _
    $region35: #{decode_stage_forward.3} parent=1 // pred_check_branch
      %719 = sbr.rel (0) target = $region37
    $region36: #{decode_stage_forward.3} parent=1 // pred_region
      %s721 = ssub.s32 256, 256
      %722 = vsyncadd [#allocation6], %s721
      %s723 = sshll.u32 [#allocation5], 4
      %s724 = int_to_ptr.vmem [resolvable:$true] %s723
      %729 = dma.vmem_to_hbm [thread:$0]  %s724, 256, %s8, [#allocation6], 128, 128, 8
    $region37: #{decode_stage_forward.3} parent=1 // pred_fallthru
      _
    // Predicated region
    $region38: #{decode_stage_forward.3} parent=1 // pred_check
      _
    $region39: #{decode_stage_forward.3} parent=1 // pred_check_branch
      %731 = sbr.rel (0) target = $region41
    $region40: #{decode_stage_forward.3} parent=1 // pred_region
      %732 = dma.done [#allocation6], 256
    $region41: #{decode_stage_forward.3} parent=1 // pred_fallthru
      _
    %733 = vsyncpa [#allocation6], 1

</llo_original>
